<compile_context>
chip_gen: v5e
topology: v5e:2x2
jax: 0.10.0
libtpu: 0.0.40
codegen_flags: <defaults>
</compile_context>

<pallas_src>
import functools

import jax
import jax.numpy as jnp
import numpy as np
from jax import lax
from jax.experimental import pallas as pl
from jax.experimental.pallas import tpu as pltpu

EPS = 1e-5  # nn.InstanceNorm2d default eps


# ----------------------------------------------------------------------------
# Fused Pallas kernel: per grid step, B images -> conv+IN+ReLU -> conv+IN -> +residual
# ----------------------------------------------------------------------------
def _make_fused_kernel(H, W, C, B, dil):
    HW = H * W
    inv_hw = 1.0 / HW
    w_pow2 = (W & (W - 1)) == 0

    def kernel(x_ref, w1_ref, w2_ref, o_ref):
        # ---- hoisted index vector & memoized boundary masks (shared by both stages) ----
        pidx = lax.broadcasted_iota(jnp.int32, (C, HW), 1)            # flat pixel index
        jcol = jnp.bitwise_and(pidx, W - 1) if w_pow2 else pidx % W   # column index

        mask_cache = {}

        def row_eq(i):  # mask of pixels in image-row i (no division needed)
            key = ("r", i)
            if key not in mask_cache:
                mask_cache[key] = (pidx >= i * W) & (pidx < (i + 1) * W)
            return mask_cache[key]

        def col_eq(j):  # mask of pixels in image-column j
            key = ("c", j)
            if key not in mask_cache:
                mask_cache[key] = jcol == j
            return mask_cache[key]

        def rolled(a, off, cache):
            # Value at flat pixel p comes from p + off (circular).  Wrapped lanes are only
            # ever produced at reflection-boundary positions, which the masks overwrite.
            if off % HW == 0:
                return a
            if off not in cache:
                cache[off] = pltpu.roll(a, (-off) % HW, axis=1)       # XLU lane rotate
            return cache[off]

        def reflect_taps(z, d):
            """Yield (tap_index, tap) for the 9 reflect-padded taps of a 3x3 conv, dilation d.
            tap[c, i*W+j] == z[c, refl(i+dh)*W + refl(j+dw)], dh/dw = (k-1)*d.
            Built as 3 row-resolved slabs + rolled column shifts + masked boundary fixups."""
            row_cache = {}
            for kh in range(3):
                dh = (kh - 1) * d
                r = rolled(z, dh * W, row_cache)
                if dh < 0:                                            # reflected top rows
                    for i in range(-dh):
                        r = jnp.where(row_eq(i),
                                      rolled(z, (-2 * i - dh) * W, row_cache), r)
                elif dh > 0:                                          # reflected bottom rows
                    for i in range(H - dh, H):
                        r = jnp.where(row_eq(i),
                                      rolled(z, (2 * (H - 1) - 2 * i - dh) * W, row_cache), r)
                col_cache = {}
                for kw in range(3):
                    dw = (kw - 1) * d
                    t = rolled(r, dw, col_cache)
                    if dw < 0:                                        # reflected left cols
                        for j in range(-dw):
                            t = jnp.where(col_eq(j),
                                          rolled(r, -2 * j - dw, col_cache), t)
                    elif dw > 0:                                      # reflected right cols
                        for j in range(W - dw, W):
                            t = jnp.where(col_eq(j),
                                          rolled(r, 2 * (W - 1) - 2 * j - dw, col_cache), t)
                    yield kh * 3 + kw, t

        def conv3x3(z, w_taps, d):
            # 9 accumulated per-tap MXU matmuls: bf16 operands, f32 accumulation.
            acc = None
            for t, tap in reflect_taps(z, d):
                part = jnp.dot(w_taps[t], tap.astype(jnp.bfloat16),
                               preferred_element_type=jnp.float32)
                acc = part if acc is None else acc + part
            return acc

        def inorm(a):
            # InstanceNorm2d (affine=False, no running stats): per-channel stats over this
            # image's pixels.  Two-pass centered variance (no E[x^2]-E[x]^2 cancellation).
            mean = jnp.sum(a, axis=1, keepdims=True) * inv_hw
            cen = a - mean
            var = jnp.sum(cen * cen, axis=1, keepdims=True) * inv_hw
            return cen * lax.rsqrt(var + EPS)

        # Hoist the 9 per-tap (C, C) bf16 weight matrices out of the image loop.
        w1_taps = [w1_ref[t] for t in range(9)]
        w2_taps = [w2_ref[t] for t in range(9)]

        for b in range(B):                                            # images in this block
            x = x_ref[b]                                              # (C, HW) f32, lane-dense
            y1 = jnp.maximum(inorm(conv3x3(x, w1_taps, dil)), 0.0)
            y2 = inorm(conv3x3(y1, w2_taps, 1))
            o_ref[b] = (x + y2).astype(o_ref.dtype)

    return kernel


# ----------------------------------------------------------------------------
# Block-size / VMEM heuristics
# ----------------------------------------------------------------------------
def _images_per_step(N, C, HW):
    """Images per grid step: largest divisor of N that (a) leaves >= 2 grid steps when N >= 2
    (so both v7x TensorCores get work), (b) is <= 8, (c) keeps the per-step VMEM modest."""
    per_img = C * HW * 4                                   # one f32 (C, HW) slab
    cap = 8
    if N >= 2:
        cap = min(cap, N // 2)
    cap = min(cap, max(1, (16 << 20) // (20 * per_img)))   # ~20 live slabs per image
    cap = max(cap, 1)
    best = 1
    for k in range(1, cap + 1):
        if N % k == 0:
            best = k
    return best


def _vmem_limit_bytes(B, C, HW):
    blocks = 2 * 2 * B * C * HW * 4      # double-buffered f32 input + output blocks
    weights = 2 * 2 * 9 * C * C * 2      # double-buffered bf16 weight blocks
    scratch = 20 * C * HW * 4            # live rolled slabs / taps / accumulators per image
    est = blocks + weights + B * scratch
    return int(min(64 << 20, max(32 << 20, 2 * est)))      # v7x physical VMEM is 64 MiB


# ----------------------------------------------------------------------------
# Parameter preprocessing (plain JAX glue)
# ----------------------------------------------------------------------------
def spectral_normalize(w, key, n_iter=50):
    """nn.utils.spectral_norm semantics: divide the weight by its largest singular value,
    estimated by power iteration on the (Cout, Cin*k*k) matrix."""
    mat = w.reshape(w.shape[0], -1)
    u = jax.random.normal(key, (mat.shape[0],), dtype=w.dtype)
    u = u / (jnp.linalg.norm(u) + 1e-12)
    v = None
    for _ in range(n_iter):
        v = mat.T @ u
        v = v / (jnp.linalg.norm(v) + 1e-12)
        u = mat @ v
        u = u / (jnp.linalg.norm(u) + 1e-12)
    sigma = u @ (mat @ v)
    return w / sigma


# ----------------------------------------------------------------------------
# ResnetBlock forward
# ----------------------------------------------------------------------------
@functools.partial(jax.jit, static_argnames=("dilation",))
def resnet_block(x_nchw, w1_sn, w2_sn, dilation=1):
    """x_nchw: (N, C, H, W) f32;  w*_sn: spectrally-normalized (C, C, 3, 3) f32."""
    N, C, H, W = x_nchw.shape
    HW = H * W
    assert HW % 128 == 0, f"H*W must be a multiple of 128 for lane-dense stores (H*W={HW})"
    # TODO(synk): pad H*W up to a lane multiple (and mask the InstanceNorm stats) for
    # arbitrary spatial sizes; the SPSR shapes used with this block satisfy this already.
    assert dilation < H and dilation < W, "reflection pad requires dilation < H, W"

    # Zero-pad channels up to a sublane multiple; padded channels flow through conv/IN/ReLU
    # as exact zeros (zero weights, zero stats) and are sliced off at the end.
    Cp = -(-C // 8) * 8
    x = x_nchw.reshape(N, C, HW)                      # channel-major, lane-dense (free reshape)
    w1, w2 = w1_sn, w2_sn
    if Cp != C:
        x = jnp.pad(x, ((0, 0), (0, Cp - C), (0, 0)))
        w1 = jnp.pad(w1, ((0, Cp - C), (0, Cp - C), (0, 0), (0, 0)))
        w2 = jnp.pad(w2, ((0, Cp - C), (0, Cp - C), (0, 0), (0, 0)))

    # (Cout, Cin, 3, 3) -> (9, Cout, Cin), row t = kh*3 + kw; bf16 MXU operands.
    w1_9 = jnp.transpose(w1, (2, 3, 0, 1)).reshape(9, Cp, Cp).astype(jnp.bfloat16)
    w2_9 = jnp.transpose(w2, (2, 3, 0, 1)).reshape(9, Cp, Cp).astype(jnp.bfloat16)

    B = _images_per_step(N, Cp, HW)
    # NOTE: the weight BlockSpecs have constant index maps; at production C they could use
    # pipeline_mode=pl.Buffered(1) to save one buffer each of VMEM (tiny at these sizes).
    y = pl.pallas_call(
        _make_fused_kernel(H, W, Cp, B, dilation),
        out_shape=jax.ShapeDtypeStruct((N, Cp, HW), x_nchw.dtype),
        grid=(N // B,),
        in_specs=[
            pl.BlockSpec((B, Cp, HW), lambda n: (n, 0, 0)),
            pl.BlockSpec((9, Cp, Cp), lambda n: (0, 0, 0)),
            pl.BlockSpec((9, Cp, Cp), lambda n: (0, 0, 0)),
        ],
        out_specs=pl.BlockSpec((B, Cp, HW), lambda n: (n, 0, 0)),
        compiler_params=pltpu.CompilerParams(
            dimension_semantics=("parallel",),
            vmem_limit_bytes=_vmem_limit_bytes(B, Cp, HW)),
    )(x, w1_9, w2_9)

    if Cp != C:
        y = y[:, :C]
    return y.reshape(N, C, H, W)


# ----------------------------------------------------------------------------
# Pure-JAX reference (for correctness check)
# ----------------------------------------------------------------------------
def ref_resnet_block(x, w1_sn, w2_sn, dilation=1):
    def conv(inp, w, dil):
        p = jnp.pad(inp, ((0, 0), (0, 0), (dil, dil), (dil, dil)), mode="reflect")
        return jax.lax.conv_general_dilated(
            p, w, window_strides=(1, 1), padding="VALID",
            rhs_dilation=(dil, dil),
            dimension_numbers=("NCHW", "OIHW", "NCHW"),
            precision=jax.lax.Precision.HIGHEST)

    def inorm(z):
        m = jnp.mean(z, axis=(2, 3), keepdims=True)
        v = jnp.mean((z - m) ** 2, axis=(2, 3), keepdims=True)
        return (z - m) * jax.lax.rsqrt(v + EPS)

    y = jnp.maximum(inorm(conv(x, w1_sn, dilation)), 0.0)
    y = inorm(conv(y, w2_sn, 1))
    return x + y


# ----------------------------------------------------------------------------
if __name__ == "__main__":
    N, C, H, W = 2, 8, 16, 16
    dilation = 1  # module default

    key = jax.random.PRNGKey(0)
    kx, kw1, kw2, ku1, ku2 = jax.random.split(key, 5)

    x = jax.random.normal(kx, (N, C, H, W), dtype=jnp.float32)

    # Conv2d default-style init (uniform in +/- 1/sqrt(fan_in)), bias=False
    bound = 1.0 / np.sqrt(C * 3 * 3)
    w1 = jax.random.uniform(kw1, (C, C, 3, 3), jnp.float32, -bound, bound)
    w2 = jax.random.uniform(kw2, (C, C, 3, 3), jnp.float32, -bound, bound)

    # Spectral normalization of the weights (shared by kernel & reference)
    w1_sn = spectral_normalize(w1, ku1)
    w2_sn = spectral_normalize(w2, ku2)

    out = jax.block_until_ready(resnet_block(x, w1_sn, w2_sn, dilation=dilation))
    ref = jax.block_until_ready(ref_resnet_block(x, w1_sn, w2_sn, dilation=dilation))

    # The kernel uses bf16 MXU operands (f32 accumulation) through two chained conv +
    # instance-norm stages, so allow bf16-level mismatch vs the f32 reference.
    np.testing.assert_allclose(np.asarray(out), np.asarray(ref), atol=5e-2, rtol=5e-3)

    print("KERNEL_OK")
</pallas_src>

<mosaic_0001>
module attributes {stable_mosaic.version = 11 : i64} {
  func.func @kernel(%arg0: i32, %arg1: memref<1x8x256xf32, #tpu.memory_space<vmem>>, %arg2: memref<9x8x8xbf16, #tpu.memory_space<vmem>>, %arg3: memref<9x8x8xbf16, #tpu.memory_space<vmem>>, %arg4: memref<1x8x256xf32, #tpu.memory_space<vmem>>) attributes {dimension_semantics = [#tpu.dimension_semantics<parallel>], iteration_bounds = array<i64: 2>, scalar_prefetch = 0 : i64, scratch_operands = 0 : i64, tpu.core_type = #tpu.core_type<tc>, window_params = [{transform_indices = @transform_0, window_bounds = array<i64: 1, 8, 256>}, {pipeline_mode = #tpu.pipeline_mode<synchronous>, transform_indices = @transform_1, window_bounds = array<i64: 9, 8, 8>}, {pipeline_mode = #tpu.pipeline_mode<synchronous>, transform_indices = @transform_2, window_bounds = array<i64: 9, 8, 8>}, {transform_indices = @transform_3, window_bounds = array<i64: 1, 8, 256>}]} {
    %0 = tpu.iota {dimensions = array<i32: 1>} : vector<8x256xi32>
    %c15_i32 = arith.constant 15 : i32
    %1 = vector.broadcast %c15_i32 : i32 to vector<8x256xi32>
    %2 = arith.andi %0, %1 : vector<8x256xi32>
    %c0 = arith.constant 0 : index
    %c0_0 = arith.constant 0 : index
    %c0_1 = arith.constant 0 : index
    %3 = vector.load %arg2[%c0, %c0_0, %c0_1] : memref<9x8x8xbf16, #tpu.memory_space<vmem>>, vector<1x8x8xbf16>
    %4 = vector.shape_cast %3 : vector<1x8x8xbf16> to vector<8x8xbf16>
    %c1 = arith.constant 1 : index
    %c0_2 = arith.constant 0 : index
    %c0_3 = arith.constant 0 : index
    %5 = vector.load %arg2[%c1, %c0_2, %c0_3] : memref<9x8x8xbf16, #tpu.memory_space<vmem>>, vector<1x8x8xbf16>
    %6 = vector.shape_cast %5 : vector<1x8x8xbf16> to vector<8x8xbf16>
    %c2 = arith.constant 2 : index
    %c0_4 = arith.constant 0 : index
    %c0_5 = arith.constant 0 : index
    %7 = vector.load %arg2[%c2, %c0_4, %c0_5] : memref<9x8x8xbf16, #tpu.memory_space<vmem>>, vector<1x8x8xbf16>
    %8 = vector.shape_cast %7 : vector<1x8x8xbf16> to vector<8x8xbf16>
    %c3 = arith.constant 3 : index
    %c0_6 = arith.constant 0 : index
    %c0_7 = arith.constant 0 : index
    %9 = vector.load %arg2[%c3, %c0_6, %c0_7] : memref<9x8x8xbf16, #tpu.memory_space<vmem>>, vector<1x8x8xbf16>
    %10 = vector.shape_cast %9 : vector<1x8x8xbf16> to vector<8x8xbf16>
    %c4 = arith.constant 4 : index
    %c0_8 = arith.constant 0 : index
    %c0_9 = arith.constant 0 : index
    %11 = vector.load %arg2[%c4, %c0_8, %c0_9] : memref<9x8x8xbf16, #tpu.memory_space<vmem>>, vector<1x8x8xbf16>
    %12 = vector.shape_cast %11 : vector<1x8x8xbf16> to vector<8x8xbf16>
    %c5 = arith.constant 5 : index
    %c0_10 = arith.constant 0 : index
    %c0_11 = arith.constant 0 : index
    %13 = vector.load %arg2[%c5, %c0_10, %c0_11] : memref<9x8x8xbf16, #tpu.memory_space<vmem>>, vector<1x8x8xbf16>
    %14 = vector.shape_cast %13 : vector<1x8x8xbf16> to vector<8x8xbf16>
    %c6 = arith.constant 6 : index
    %c0_12 = arith.constant 0 : index
    %c0_13 = arith.constant 0 : index
    %15 = vector.load %arg2[%c6, %c0_12, %c0_13] : memref<9x8x8xbf16, #tpu.memory_space<vmem>>, vector<1x8x8xbf16>
    %16 = vector.shape_cast %15 : vector<1x8x8xbf16> to vector<8x8xbf16>
    %c7 = arith.constant 7 : index
    %c0_14 = arith.constant 0 : index
    %c0_15 = arith.constant 0 : index
    %17 = vector.load %arg2[%c7, %c0_14, %c0_15] : memref<9x8x8xbf16, #tpu.memory_space<vmem>>, vector<1x8x8xbf16>
    %18 = vector.shape_cast %17 : vector<1x8x8xbf16> to vector<8x8xbf16>
    %c8 = arith.constant 8 : index
    %c0_16 = arith.constant 0 : index
    %c0_17 = arith.constant 0 : index
    %19 = vector.load %arg2[%c8, %c0_16, %c0_17] : memref<9x8x8xbf16, #tpu.memory_space<vmem>>, vector<1x8x8xbf16>
    %20 = vector.shape_cast %19 : vector<1x8x8xbf16> to vector<8x8xbf16>
    %c0_18 = arith.constant 0 : index
    %c0_19 = arith.constant 0 : index
    %c0_20 = arith.constant 0 : index
    %21 = vector.load %arg3[%c0_18, %c0_19, %c0_20] : memref<9x8x8xbf16, #tpu.memory_space<vmem>>, vector<1x8x8xbf16>
    %22 = vector.shape_cast %21 : vector<1x8x8xbf16> to vector<8x8xbf16>
    %c1_21 = arith.constant 1 : index
    %c0_22 = arith.constant 0 : index
    %c0_23 = arith.constant 0 : index
    %23 = vector.load %arg3[%c1_21, %c0_22, %c0_23] : memref<9x8x8xbf16, #tpu.memory_space<vmem>>, vector<1x8x8xbf16>
    %24 = vector.shape_cast %23 : vector<1x8x8xbf16> to vector<8x8xbf16>
    %c2_24 = arith.constant 2 : index
    %c0_25 = arith.constant 0 : index
    %c0_26 = arith.constant 0 : index
    %25 = vector.load %arg3[%c2_24, %c0_25, %c0_26] : memref<9x8x8xbf16, #tpu.memory_space<vmem>>, vector<1x8x8xbf16>
    %26 = vector.shape_cast %25 : vector<1x8x8xbf16> to vector<8x8xbf16>
    %c3_27 = arith.constant 3 : index
    %c0_28 = arith.constant 0 : index
    %c0_29 = arith.constant 0 : index
    %27 = vector.load %arg3[%c3_27, %c0_28, %c0_29] : memref<9x8x8xbf16, #tpu.memory_space<vmem>>, vector<1x8x8xbf16>
    %28 = vector.shape_cast %27 : vector<1x8x8xbf16> to vector<8x8xbf16>
    %c4_30 = arith.constant 4 : index
    %c0_31 = arith.constant 0 : index
    %c0_32 = arith.constant 0 : index
    %29 = vector.load %arg3[%c4_30, %c0_31, %c0_32] : memref<9x8x8xbf16, #tpu.memory_space<vmem>>, vector<1x8x8xbf16>
    %30 = vector.shape_cast %29 : vector<1x8x8xbf16> to vector<8x8xbf16>
    %c5_33 = arith.constant 5 : index
    %c0_34 = arith.constant 0 : index
    %c0_35 = arith.constant 0 : index
    %31 = vector.load %arg3[%c5_33, %c0_34, %c0_35] : memref<9x8x8xbf16, #tpu.memory_space<vmem>>, vector<1x8x8xbf16>
    %32 = vector.shape_cast %31 : vector<1x8x8xbf16> to vector<8x8xbf16>
    %c6_36 = arith.constant 6 : index
    %c0_37 = arith.constant 0 : index
    %c0_38 = arith.constant 0 : index
    %33 = vector.load %arg3[%c6_36, %c0_37, %c0_38] : memref<9x8x8xbf16, #tpu.memory_space<vmem>>, vector<1x8x8xbf16>
    %34 = vector.shape_cast %33 : vector<1x8x8xbf16> to vector<8x8xbf16>
    %c7_39 = arith.constant 7 : index
    %c0_40 = arith.constant 0 : index
    %c0_41 = arith.constant 0 : index
    %35 = vector.load %arg3[%c7_39, %c0_40, %c0_41] : memref<9x8x8xbf16, #tpu.memory_space<vmem>>, vector<1x8x8xbf16>
    %36 = vector.shape_cast %35 : vector<1x8x8xbf16> to vector<8x8xbf16>
    %c8_42 = arith.constant 8 : index
    %c0_43 = arith.constant 0 : index
    %c0_44 = arith.constant 0 : index
    %37 = vector.load %arg3[%c8_42, %c0_43, %c0_44] : memref<9x8x8xbf16, #tpu.memory_space<vmem>>, vector<1x8x8xbf16>
    %38 = vector.shape_cast %37 : vector<1x8x8xbf16> to vector<8x8xbf16>
    %c0_45 = arith.constant 0 : index
    %c0_46 = arith.constant 0 : index
    %c0_47 = arith.constant 0 : index
    %39 = vector.load %arg1[%c0_45, %c0_46, %c0_47] : memref<1x8x256xf32, #tpu.memory_space<vmem>>, vector<1x8x256xf32>
    %40 = vector.shape_cast %39 : vector<1x8x256xf32> to vector<8x256xf32>
    %c16_i32 = arith.constant 16 : i32
    %41 = tpu.dynamic_rotate %40 by %c16_i32 dim 1 : vector<8x256xf32>, i32 -> vector<8x256xf32>
    %c0_i32 = arith.constant 0 : i32
    %42 = vector.broadcast %c0_i32 : i32 to vector<8x256xi32>
    %43 = arith.cmpi sge, %0, %42 : vector<8x256xi32>
    %c16_i32_48 = arith.constant 16 : i32
    %44 = vector.broadcast %c16_i32_48 : i32 to vector<8x256xi32>
    %45 = arith.cmpi slt, %0, %44 : vector<8x256xi32>
    %46 = arith.andi %43, %45 : vector<8x256xi1>
    %c240_i32 = arith.constant 240 : i32
    %47 = tpu.dynamic_rotate %40 by %c240_i32 dim 1 : vector<8x256xf32>, i32 -> vector<8x256xf32>
    %48 = arith.select %46, %47, %41 : vector<8x256xi1>, vector<8x256xf32>
    %c1_i32 = arith.constant 1 : i32
    %49 = tpu.dynamic_rotate %48 by %c1_i32 dim 1 : vector<8x256xf32>, i32 -> vector<8x256xf32>
    %c0_i32_49 = arith.constant 0 : i32
    %50 = vector.broadcast %c0_i32_49 : i32 to vector<8x256xi32>
    %51 = arith.cmpi eq, %2, %50 : vector<8x256xi32>
    %c255_i32 = arith.constant 255 : i32
    %52 = tpu.dynamic_rotate %48 by %c255_i32 dim 1 : vector<8x256xf32>, i32 -> vector<8x256xf32>
    %53 = arith.select %51, %52, %49 : vector<8x256xi1>, vector<8x256xf32>
    %54 = arith.truncf %53 : vector<8x256xf32> to vector<8x256xbf16>
    %cst = arith.constant dense<0.000000e+00> : vector<8x256xf32>
    %55 = tpu.matmul %4, %54, %cst {dimension_numbers = #tpu.dot_dimension_numbers<[1], [0], [0], [1], [0, 0, 1, 1], [], []>} : vector<8x8xbf16>, vector<8x256xbf16>, vector<8x256xf32> -> vector<8x256xf32>
    %56 = arith.truncf %48 : vector<8x256xf32> to vector<8x256xbf16>
    %cst_50 = arith.constant dense<0.000000e+00> : vector<8x256xf32>
    %57 = tpu.matmul %6, %56, %cst_50 {dimension_numbers = #tpu.dot_dimension_numbers<[1], [0], [0], [1], [0, 0, 1, 1], [], []>} : vector<8x8xbf16>, vector<8x256xbf16>, vector<8x256xf32> -> vector<8x256xf32>
    %58 = arith.addf %55, %57 : vector<8x256xf32>
    %c15_i32_51 = arith.constant 15 : i32
    %59 = vector.broadcast %c15_i32_51 : i32 to vector<8x256xi32>
    %60 = arith.cmpi eq, %2, %59 : vector<8x256xi32>
    %61 = arith.select %60, %49, %52 : vector<8x256xi1>, vector<8x256xf32>
    %62 = arith.truncf %61 : vector<8x256xf32> to vector<8x256xbf16>
    %cst_52 = arith.constant dense<0.000000e+00> : vector<8x256xf32>
    %63 = tpu.matmul %8, %62, %cst_52 {dimension_numbers = #tpu.dot_dimension_numbers<[1], [0], [0], [1], [0, 0, 1, 1], [], []>} : vector<8x8xbf16>, vector<8x256xbf16>, vector<8x256xf32> -> vector<8x256xf32>
    %64 = arith.addf %58, %63 : vector<8x256xf32>
    %c1_i32_53 = arith.constant 1 : i32
    %65 = tpu.dynamic_rotate %40 by %c1_i32_53 dim 1 : vector<8x256xf32>, i32 -> vector<8x256xf32>
    %c255_i32_54 = arith.constant 255 : i32
    %66 = tpu.dynamic_rotate %40 by %c255_i32_54 dim 1 : vector<8x256xf32>, i32 -> vector<8x256xf32>
    %67 = arith.select %51, %66, %65 : vector<8x256xi1>, vector<8x256xf32>
    %68 = arith.truncf %67 : vector<8x256xf32> to vector<8x256xbf16>
    %cst_55 = arith.constant dense<0.000000e+00> : vector<8x256xf32>
    %69 = tpu.matmul %10, %68, %cst_55 {dimension_numbers = #tpu.dot_dimension_numbers<[1], [0], [0], [1], [0, 0, 1, 1], [], []>} : vector<8x8xbf16>, vector<8x256xbf16>, vector<8x256xf32> -> vector<8x256xf32>
    %70 = arith.addf %64, %69 : vector<8x256xf32>
    %71 = arith.truncf %40 : vector<8x256xf32> to vector<8x256xbf16>
    %cst_56 = arith.constant dense<0.000000e+00> : vector<8x256xf32>
    %72 = tpu.matmul %12, %71, %cst_56 {dimension_numbers = #tpu.dot_dimension_numbers<[1], [0], [0], [1], [0, 0, 1, 1], [], []>} : vector<8x8xbf16>, vector<8x256xbf16>, vector<8x256xf32> -> vector<8x256xf32>
    %73 = arith.addf %70, %72 : vector<8x256xf32>
    %74 = arith.select %60, %65, %66 : vector<8x256xi1>, vector<8x256xf32>
    %75 = arith.truncf %74 : vector<8x256xf32> to vector<8x256xbf16>
    %cst_57 = arith.constant dense<0.000000e+00> : vector<8x256xf32>
    %76 = tpu.matmul %14, %75, %cst_57 {dimension_numbers = #tpu.dot_dimension_numbers<[1], [0], [0], [1], [0, 0, 1, 1], [], []>} : vector<8x8xbf16>, vector<8x256xbf16>, vector<8x256xf32> -> vector<8x256xf32>
    %77 = arith.addf %73, %76 : vector<8x256xf32>
    %c240_i32_58 = arith.constant 240 : i32
    %78 = vector.broadcast %c240_i32_58 : i32 to vector<8x256xi32>
    %79 = arith.cmpi sge, %0, %78 : vector<8x256xi32>
    %c256_i32 = arith.constant 256 : i32
    %80 = vector.broadcast %c256_i32 : i32 to vector<8x256xi32>
    %81 = arith.cmpi slt, %0, %80 : vector<8x256xi32>
    %82 = arith.andi %79, %81 : vector<8x256xi1>
    %83 = arith.select %82, %41, %47 : vector<8x256xi1>, vector<8x256xf32>
    %c1_i32_59 = arith.constant 1 : i32
    %84 = tpu.dynamic_rotate %83 by %c1_i32_59 dim 1 : vector<8x256xf32>, i32 -> vector<8x256xf32>
    %c255_i32_60 = arith.constant 255 : i32
    %85 = tpu.dynamic_rotate %83 by %c255_i32_60 dim 1 : vector<8x256xf32>, i32 -> vector<8x256xf32>
    %86 = arith.select %51, %85, %84 : vector<8x256xi1>, vector<8x256xf32>
    %87 = arith.truncf %86 : vector<8x256xf32> to vector<8x256xbf16>
    %cst_61 = arith.constant dense<0.000000e+00> : vector<8x256xf32>
    %88 = tpu.matmul %16, %87, %cst_61 {dimension_numbers = #tpu.dot_dimension_numbers<[1], [0], [0], [1], [0, 0, 1, 1], [], []>} : vector<8x8xbf16>, vector<8x256xbf16>, vector<8x256xf32> -> vector<8x256xf32>
    %89 = arith.addf %77, %88 : vector<8x256xf32>
    %90 = arith.truncf %83 : vector<8x256xf32> to vector<8x256xbf16>
    %cst_62 = arith.constant dense<0.000000e+00> : vector<8x256xf32>
    %91 = tpu.matmul %18, %90, %cst_62 {dimension_numbers = #tpu.dot_dimension_numbers<[1], [0], [0], [1], [0, 0, 1, 1], [], []>} : vector<8x8xbf16>, vector<8x256xbf16>, vector<8x256xf32> -> vector<8x256xf32>
    %92 = arith.addf %89, %91 : vector<8x256xf32>
    %93 = arith.select %60, %84, %85 : vector<8x256xi1>, vector<8x256xf32>
    %94 = arith.truncf %93 : vector<8x256xf32> to vector<8x256xbf16>
    %cst_63 = arith.constant dense<0.000000e+00> : vector<8x256xf32>
    %95 = tpu.matmul %20, %94, %cst_63 {dimension_numbers = #tpu.dot_dimension_numbers<[1], [0], [0], [1], [0, 0, 1, 1], [], []>} : vector<8x8xbf16>, vector<8x256xbf16>, vector<8x256xf32> -> vector<8x256xf32>
    %96 = arith.addf %92, %95 : vector<8x256xf32>
    %cst_64 = arith.constant dense<0.000000e+00> : vector<8xf32>
    %97 = vector.multi_reduction <add>, %96, %cst_64 [1] : vector<8x256xf32> to vector<8xf32>
    %98 = vector.shape_cast %97 : vector<8xf32> to vector<8x1xf32>
    %cst_65 = arith.constant 3.906250e-03 : f32
    %99 = vector.broadcast %cst_65 : f32 to vector<8x1xf32>
    %100 = arith.mulf %98, %99 : vector<8x1xf32>
    %101 = vector.broadcast %100 : vector<8x1xf32> to vector<8x256xf32>
    %102 = arith.subf %96, %101 : vector<8x256xf32>
    %103 = arith.mulf %102, %102 : vector<8x256xf32>
    %cst_66 = arith.constant dense<0.000000e+00> : vector<8xf32>
    %104 = vector.multi_reduction <add>, %103, %cst_66 [1] : vector<8x256xf32> to vector<8xf32>
    %105 = vector.shape_cast %104 : vector<8xf32> to vector<8x1xf32>
    %cst_67 = arith.constant 3.906250e-03 : f32
    %106 = vector.broadcast %cst_67 : f32 to vector<8x1xf32>
    %107 = arith.mulf %105, %106 : vector<8x1xf32>
    %cst_68 = arith.constant 9.99999974E-6 : f32
    %108 = vector.broadcast %cst_68 : f32 to vector<8x1xf32>
    %109 = arith.addf %107, %108 : vector<8x1xf32>
    %110 = math.rsqrt %109 : vector<8x1xf32>
    %111 = vector.broadcast %110 : vector<8x1xf32> to vector<8x256xf32>
    %112 = arith.mulf %102, %111 : vector<8x256xf32>
    %cst_69 = arith.constant 0.000000e+00 : f32
    %113 = vector.broadcast %cst_69 : f32 to vector<8x256xf32>
    %114 = arith.maximumf %112, %113 : vector<8x256xf32>
    %c16_i32_70 = arith.constant 16 : i32
    %115 = tpu.dynamic_rotate %114 by %c16_i32_70 dim 1 : vector<8x256xf32>, i32 -> vector<8x256xf32>
    %c240_i32_71 = arith.constant 240 : i32
    %116 = tpu.dynamic_rotate %114 by %c240_i32_71 dim 1 : vector<8x256xf32>, i32 -> vector<8x256xf32>
    %117 = arith.select %46, %116, %115 : vector<8x256xi1>, vector<8x256xf32>
    %c1_i32_72 = arith.constant 1 : i32
    %118 = tpu.dynamic_rotate %117 by %c1_i32_72 dim 1 : vector<8x256xf32>, i32 -> vector<8x256xf32>
    %c255_i32_73 = arith.constant 255 : i32
    %119 = tpu.dynamic_rotate %117 by %c255_i32_73 dim 1 : vector<8x256xf32>, i32 -> vector<8x256xf32>
    %120 = arith.select %51, %119, %118 : vector<8x256xi1>, vector<8x256xf32>
    %121 = arith.truncf %120 : vector<8x256xf32> to vector<8x256xbf16>
    %cst_74 = arith.constant dense<0.000000e+00> : vector<8x256xf32>
    %122 = tpu.matmul %22, %121, %cst_74 {dimension_numbers = #tpu.dot_dimension_numbers<[1], [0], [0], [1], [0, 0, 1, 1], [], []>} : vector<8x8xbf16>, vector<8x256xbf16>, vector<8x256xf32> -> vector<8x256xf32>
    %123 = arith.truncf %117 : vector<8x256xf32> to vector<8x256xbf16>
    %cst_75 = arith.constant dense<0.000000e+00> : vector<8x256xf32>
    %124 = tpu.matmul %24, %123, %cst_75 {dimension_numbers = #tpu.dot_dimension_numbers<[1], [0], [0], [1], [0, 0, 1, 1], [], []>} : vector<8x8xbf16>, vector<8x256xbf16>, vector<8x256xf32> -> vector<8x256xf32>
    %125 = arith.addf %122, %124 : vector<8x256xf32>
    %126 = arith.select %60, %118, %119 : vector<8x256xi1>, vector<8x256xf32>
    %127 = arith.truncf %126 : vector<8x256xf32> to vector<8x256xbf16>
    %cst_76 = arith.constant dense<0.000000e+00> : vector<8x256xf32>
    %128 = tpu.matmul %26, %127, %cst_76 {dimension_numbers = #tpu.dot_dimension_numbers<[1], [0], [0], [1], [0, 0, 1, 1], [], []>} : vector<8x8xbf16>, vector<8x256xbf16>, vector<8x256xf32> -> vector<8x256xf32>
    %129 = arith.addf %125, %128 : vector<8x256xf32>
    %c1_i32_77 = arith.constant 1 : i32
    %130 = tpu.dynamic_rotate %114 by %c1_i32_77 dim 1 : vector<8x256xf32>, i32 -> vector<8x256xf32>
    %c255_i32_78 = arith.constant 255 : i32
    %131 = tpu.dynamic_rotate %114 by %c255_i32_78 dim 1 : vector<8x256xf32>, i32 -> vector<8x256xf32>
    %132 = arith.select %51, %131, %130 : vector<8x256xi1>, vector<8x256xf32>
    %133 = arith.truncf %132 : vector<8x256xf32> to vector<8x256xbf16>
    %cst_79 = arith.constant dense<0.000000e+00> : vector<8x256xf32>
    %134 = tpu.matmul %28, %133, %cst_79 {dimension_numbers = #tpu.dot_dimension_numbers<[1], [0], [0], [1], [0, 0, 1, 1], [], []>} : vector<8x8xbf16>, vector<8x256xbf16>, vector<8x256xf32> -> vector<8x256xf32>
    %135 = arith.addf %129, %134 : vector<8x256xf32>
    %136 = arith.truncf %114 : vector<8x256xf32> to vector<8x256xbf16>
    %cst_80 = arith.constant dense<0.000000e+00> : vector<8x256xf32>
    %137 = tpu.matmul %30, %136, %cst_80 {dimension_numbers = #tpu.dot_dimension_numbers<[1], [0], [0], [1], [0, 0, 1, 1], [], []>} : vector<8x8xbf16>, vector<8x256xbf16>, vector<8x256xf32> -> vector<8x256xf32>
    %138 = arith.addf %135, %137 : vector<8x256xf32>
    %139 = arith.select %60, %130, %131 : vector<8x256xi1>, vector<8x256xf32>
    %140 = arith.truncf %139 : vector<8x256xf32> to vector<8x256xbf16>
    %cst_81 = arith.constant dense<0.000000e+00> : vector<8x256xf32>
    %141 = tpu.matmul %32, %140, %cst_81 {dimension_numbers = #tpu.dot_dimension_numbers<[1], [0], [0], [1], [0, 0, 1, 1], [], []>} : vector<8x8xbf16>, vector<8x256xbf16>, vector<8x256xf32> -> vector<8x256xf32>
    %142 = arith.addf %138, %141 : vector<8x256xf32>
    %143 = arith.select %82, %115, %116 : vector<8x256xi1>, vector<8x256xf32>
    %c1_i32_82 = arith.constant 1 : i32
    %144 = tpu.dynamic_rotate %143 by %c1_i32_82 dim 1 : vector<8x256xf32>, i32 -> vector<8x256xf32>
    %c255_i32_83 = arith.constant 255 : i32
    %145 = tpu.dynamic_rotate %143 by %c255_i32_83 dim 1 : vector<8x256xf32>, i32 -> vector<8x256xf32>
    %146 = arith.select %51, %145, %144 : vector<8x256xi1>, vector<8x256xf32>
    %147 = arith.truncf %146 : vector<8x256xf32> to vector<8x256xbf16>
    %cst_84 = arith.constant dense<0.000000e+00> : vector<8x256xf32>
    %148 = tpu.matmul %34, %147, %cst_84 {dimension_numbers = #tpu.dot_dimension_numbers<[1], [0], [0], [1], [0, 0, 1, 1], [], []>} : vector<8x8xbf16>, vector<8x256xbf16>, vector<8x256xf32> -> vector<8x256xf32>
    %149 = arith.addf %142, %148 : vector<8x256xf32>
    %150 = arith.truncf %143 : vector<8x256xf32> to vector<8x256xbf16>
    %cst_85 = arith.constant dense<0.000000e+00> : vector<8x256xf32>
    %151 = tpu.matmul %36, %150, %cst_85 {dimension_numbers = #tpu.dot_dimension_numbers<[1], [0], [0], [1], [0, 0, 1, 1], [], []>} : vector<8x8xbf16>, vector<8x256xbf16>, vector<8x256xf32> -> vector<8x256xf32>
    %152 = arith.addf %149, %151 : vector<8x256xf32>
    %153 = arith.select %60, %144, %145 : vector<8x256xi1>, vector<8x256xf32>
    %154 = arith.truncf %153 : vector<8x256xf32> to vector<8x256xbf16>
    %cst_86 = arith.constant dense<0.000000e+00> : vector<8x256xf32>
    %155 = tpu.matmul %38, %154, %cst_86 {dimension_numbers = #tpu.dot_dimension_numbers<[1], [0], [0], [1], [0, 0, 1, 1], [], []>} : vector<8x8xbf16>, vector<8x256xbf16>, vector<8x256xf32> -> vector<8x256xf32>
    %156 = arith.addf %152, %155 : vector<8x256xf32>
    %cst_87 = arith.constant dense<0.000000e+00> : vector<8xf32>
    %157 = vector.multi_reduction <add>, %156, %cst_87 [1] : vector<8x256xf32> to vector<8xf32>
    %158 = vector.shape_cast %157 : vector<8xf32> to vector<8x1xf32>
    %cst_88 = arith.constant 3.906250e-03 : f32
    %159 = vector.broadcast %cst_88 : f32 to vector<8x1xf32>
    %160 = arith.mulf %158, %159 : vector<8x1xf32>
    %161 = vector.broadcast %160 : vector<8x1xf32> to vector<8x256xf32>
    %162 = arith.subf %156, %161 : vector<8x256xf32>
    %163 = arith.mulf %162, %162 : vector<8x256xf32>
    %cst_89 = arith.constant dense<0.000000e+00> : vector<8xf32>
    %164 = vector.multi_reduction <add>, %163, %cst_89 [1] : vector<8x256xf32> to vector<8xf32>
    %165 = vector.shape_cast %164 : vector<8xf32> to vector<8x1xf32>
    %cst_90 = arith.constant 3.906250e-03 : f32
    %166 = vector.broadcast %cst_90 : f32 to vector<8x1xf32>
    %167 = arith.mulf %165, %166 : vector<8x1xf32>
    %cst_91 = arith.constant 9.99999974E-6 : f32
    %168 = vector.broadcast %cst_91 : f32 to vector<8x1xf32>
    %169 = arith.addf %167, %168 : vector<8x1xf32>
    %170 = math.rsqrt %169 : vector<8x1xf32>
    %171 = vector.broadcast %170 : vector<8x1xf32> to vector<8x256xf32>
    %172 = arith.mulf %162, %171 : vector<8x256xf32>
    %173 = arith.addf %40, %172 : vector<8x256xf32>
    %c0_92 = arith.constant 0 : index
    %c0_93 = arith.constant 0 : index
    %c0_94 = arith.constant 0 : index
    %174 = vector.load %arg4[%c0_92, %c0_93, %c0_94] : memref<1x8x256xf32, #tpu.memory_space<vmem>>, vector<1x8x256xf32>
    %175 = vector.shape_cast %174 : vector<1x8x256xf32> to vector<8x256xf32>
    %176 = vector.shape_cast %173 : vector<8x256xf32> to vector<1x8x256xf32>
    tpu.vector_store %arg4[%c0_92, %c0_93, %c0_94], %176 {strides = array<i32>} : memref<1x8x256xf32, #tpu.memory_space<vmem>>, vector<1x8x256xf32>,
    return
  }
  func.func @transform_0(%arg0: i32) -> (i32, i32, i32) {
    %c0_i32 = arith.constant 0 : i32
    %c0_i32_0 = arith.constant 0 : i32
    %c0_i32_1 = arith.constant 0 : i32
    return %arg0, %c0_i32, %c0_i32_0 : i32, i32, i32
  }
  func.func @transform_1(%arg0: i32) -> (i32, i32, i32) {
    %c0_i32 = arith.constant 0 : i32
    %c0_i32_0 = arith.constant 0 : i32
    %c0_i32_1 = arith.constant 0 : i32
    %c0_i32_2 = arith.constant 0 : i32
    return %c0_i32, %c0_i32_0, %c0_i32_1 : i32, i32, i32
  }
  func.func @transform_2(%arg0: i32) -> (i32, i32, i32) {
    %c0_i32 = arith.constant 0 : i32
    %c0_i32_0 = arith.constant 0 : i32
    %c0_i32_1 = arith.constant 0 : i32
    %c0_i32_2 = arith.constant 0 : i32
    return %c0_i32, %c0_i32_0, %c0_i32_1 : i32, i32, i32
  }
  func.func @transform_3(%arg0: i32) -> (i32, i32, i32) {
    %c0_i32 = arith.constant 0 : i32
    %c0_i32_0 = arith.constant 0 : i32
    %c0_i32_1 = arith.constant 0 : i32
    return %arg0, %c0_i32, %c0_i32_0 : i32, i32, i32
  }
}

</mosaic_0001>

<llo_original>
// kernel: resnet_block.1
$region0: #{resnet_block.1}
  #allocation0 [shape = 'u32[]', space=smem, size = 0x4, offset = 0x4, fixed_abs, tag = 'smem constant byte address 0x4 - core index']
  #allocation1 [shape = 'u32[72,128]{1,0:T(1,128)}', space=vmem, size = 0x9000, scoped, tag = 'internal scratch']
  %s0 = inlined_call_operand.vmem [shape: f32[2,8,256], index: 0, kind: input, shape index: {}]
  %s1 = inlined_call_operand.vmem [shape: bf16[9,8,8], index: 1, kind: input, shape index: {}]
  %s2 = inlined_call_operand.vmem [shape: bf16[9,8,8], index: 2, kind: input, shape index: {}]
  %s3 = inlined_call_operand.vmem [shape: f32[2,8,256], index: 3, kind: output, shape index: {}]
  %s4 = sld [smem:[#allocation0]]
  $region45: #{resnet_block.1} parent=0
    _
  %s6 = ssub.s32 1, %s4
  %s7 = scalar_select 0, %s6, %s4
  loop: start=0, step=1, limit=4
  $region2: #{resnet_block.1} parent=0 // loop_pre_header
    _
  $region3: #{resnet_block.1} parent=0 // loop_header
    %s9 = sphi 0, %s13
    %p10 = scmp.ge.s32.totalorder %s9, 4
    %s19 = sphi 0, %s21
    %s22 = sphi 0, %s19
    %s23 = sphi 0, %s22
    %s39 = sphi 0, %s23
    %s43 = sphi 0, %s43
    %s45 = sphi 0, %s43
    %s46 = sphi 0, %s45
    %s60 = sphi 0, %s46
    %s64 = sphi 0, %s64
    %s66 = sphi 0, %s64
    %s67 = sphi 0, %s66
    %s81 = sphi 0, %s67
    %s87 = sphi 0, %s89
    %s90 = sphi 0, %s87
    %s91 = sphi 0, %s90
    %s107 = sphi 0, %s91
  $region4: #{resnet_block.1} parent=0 // loop_header_branch
    %12 = sbr.rel (%p10) target = $region8
  $region5: #{resnet_block.1} parent=0 // loop_body
    %s14 = ssub.s32 %s9, 1
    %s15 = ssub.s32 %s9, 2
    %s16 = sadd.s32 %s9, 1
    %s17 = ssub.s32 %s9, %s16
    %p18 = scmp.eq.s32.totalorder %s17, 0
    %s20 = sadd.s32 %s19, 1
    %s21 = scalar_select %p18, %s19, %s20
    %p24 = pneg %p18
    %p25 = scmp.eq.s32.totalorder %s9, 1
    %p26 = por %p24, %p25
    %p27 = scmp.ne.s32.totalorder %s19, %s22
    %p28 = scmp.eq.s32.totalorder %s9, 0
    %p29 = por %p27, %p28
    %p30 = scmp.ne.s32.totalorder %s19, %s22
    %p31 = scmp.eq.s32.totalorder %s14, 1
    %p32 = por %p30, %p31
    %p33 = scmp.ne.s32.totalorder %s22, %s23
    %p34 = scmp.eq.s32.totalorder %s14, 0
    %p35 = por %p33, %p34
    %p36 = scmp.ne.s32.totalorder %s22, %s23
    %p37 = scmp.eq.s32.totalorder %s15, 1
    %p38 = por %p36, %p37
    %p40 = scmp.ne.s32.totalorder %s23, %s39
    %p41 = scmp.eq.s32.totalorder %s15, 0
    %p42 = por %p40, %p41
    %s44 = sadd.s32 %s43, 1
    %p47 = scmp.eq.s32.totalorder %s9, 1
    %p48 = scmp.ne.s32.totalorder %s43, %s45
    %p49 = scmp.eq.s32.totalorder %s9, 0
    %p50 = por %p48, %p49
    %p51 = scmp.ne.s32.totalorder %s43, %s45
    %p52 = scmp.eq.s32.totalorder %s14, 1
    %p53 = por %p51, %p52
    %p54 = scmp.ne.s32.totalorder %s45, %s46
    %p55 = scmp.eq.s32.totalorder %s14, 0
    %p56 = por %p54, %p55
    %p57 = scmp.ne.s32.totalorder %s45, %s46
    %p58 = scmp.eq.s32.totalorder %s15, 1
    %p59 = por %p57, %p58
    %p61 = scmp.ne.s32.totalorder %s46, %s60
    %p62 = scmp.eq.s32.totalorder %s15, 0
    %p63 = por %p61, %p62
    %s65 = sadd.s32 %s64, 1
    %p68 = scmp.eq.s32.totalorder %s9, 1
    %p69 = scmp.ne.s32.totalorder %s64, %s66
    %p70 = scmp.eq.s32.totalorder %s9, 0
    %p71 = por %p69, %p70
    %p72 = scmp.ne.s32.totalorder %s64, %s66
    %p73 = scmp.eq.s32.totalorder %s14, 1
    %p74 = por %p72, %p73
    %p75 = scmp.ne.s32.totalorder %s66, %s67
    %p76 = scmp.eq.s32.totalorder %s14, 0
    %p77 = por %p75, %p76
    %p78 = scmp.ne.s32.totalorder %s66, %s67
    %p79 = scmp.eq.s32.totalorder %s15, 1
    %p80 = por %p78, %p79
    %p82 = scmp.ne.s32.totalorder %s67, %s81
    %p83 = scmp.eq.s32.totalorder %s15, 0
    %p84 = por %p82, %p83
    %s85 = ssub.s32 %s9, %s16
    %p86 = scmp.eq.s32.totalorder %s85, 0
    %s88 = sadd.s32 %s87, 1
    %s89 = scalar_select %p86, %s87, %s88
    %p92 = pneg %p86
    %p93 = scmp.eq.s32.totalorder %s9, 1
    %p94 = por %p92, %p93
    %p95 = scmp.ne.s32.totalorder %s87, %s90
    %p96 = scmp.eq.s32.totalorder %s9, 0
    %p97 = por %p95, %p96
    %p98 = scmp.ne.s32.totalorder %s87, %s90
    %p99 = scmp.eq.s32.totalorder %s14, 1
    %p100 = por %p98, %p99
    %p101 = scmp.ne.s32.totalorder %s90, %s91
    %p102 = scmp.eq.s32.totalorder %s14, 0
    %p103 = por %p101, %p102
    %p104 = scmp.ne.s32.totalorder %s90, %s91
    %p105 = scmp.eq.s32.totalorder %s15, 1
    %p106 = por %p104, %p105
    %p108 = scmp.ne.s32.totalorder %s91, %s107
    %p109 = scmp.eq.s32.totalorder %s15, 0
    %p110 = por %p108, %p109
    %p111 = scmp.le.s32.totalorder 1, %s9
    %p112 = scmp.lt.s32.totalorder %s9, 3
    %p113 = pnand %p111, %p112
    %p114 = pneg %p113
    // Predicated region
    $region9: #{resnet_block.1} parent=5 // pred_check
      _
    $region10: #{resnet_block.1} parent=5 // pred_check_branch
      %116 = sbr.rel (%p113) target = $region12
    $region11: #{resnet_block.1} parent=5 // pred_region
      %s117 = ssub.s32 %s9, 1
      // Predicated region
      $region13: #{resnet_block.1} parent=11 // pred_check
        %p118 = pneg %p56
      $region14: #{resnet_block.1} parent=11 // pred_check_branch
        %120 = sbr.rel (%p118) target = $region16
      $region15: #{resnet_block.1} parent=11 // pred_region
        _
      $region16: #{resnet_block.1} parent=11 // pred_fallthru
        _
      // Predicated region
      $region17: #{resnet_block.1} parent=11 // pred_check
        %p121 = pneg %p77
      $region18: #{resnet_block.1} parent=11 // pred_check_branch
        %123 = sbr.rel (%p121) target = $region20
      $region19: #{resnet_block.1} parent=11 // pred_region
        _
      $region20: #{resnet_block.1} parent=11 // pred_fallthru
        _
    $region12: #{resnet_block.1} parent=5 // pred_fallthru
      _
    %p124 = scmp.lt.s32.totalorder %s9, 2
    // Predicated region
    $region21: #{resnet_block.1} parent=5 // pred_check
      %p125 = pneg %p124
    $region22: #{resnet_block.1} parent=5 // pred_check_branch
      %127 = sbr.rel (%p125) target = $region24
    $region23: #{resnet_block.1} parent=5 // pred_region
      // Predicated region
      $region25: #{resnet_block.1} parent=23 // pred_check
        %p128 = pneg %p29
      $region26: #{resnet_block.1} parent=23 // pred_check_branch
        %130 = sbr.rel (%p128) target = $region28
      $region27: #{resnet_block.1} parent=23 // pred_region
        %p131 = scmp.lt.s32.totalorder %s9, 1
        %s132 = scalar_select %p131, %s9, 1
        %s133 = smul.addr %s132, 2
        %s134 = smul.addr %s133, 8
        %s135 = scalar_lea.vmem %s0, %s134
      $region28: #{resnet_block.1} parent=23 // pred_fallthru
        _
    $region24: #{resnet_block.1} parent=5 // pred_fallthru
      _
    %p136 = scmp.le.s32.totalorder 1, %s9
    %p137 = scmp.lt.s32.totalorder %s9, 3
    %p138 = pnand %p136, %p137
    %p139 = pneg %p138
    // Predicated region
    $region29: #{resnet_block.1} parent=5 // pred_check
      _
    $region30: #{resnet_block.1} parent=5 // pred_check_branch
      %141 = sbr.rel (%p138) target = $region32
    $region31: #{resnet_block.1} parent=5 // pred_region
      %s142 = ssub.s32 %s9, 1
      %p143 = scmp.lt.s32.totalorder %s14, 1
      %s144 = scalar_select %p143, %s14, 1
      %s145 = smul.addr %s144, 2
      %s146 = smul.addr %s145, 8
      %s147 = scalar_lea.vmem %s0, %s146
      %p148 = pneg %p35
      %p149 = pneg %p32
      %p150 = pneg %p56
      %p151 = pneg %p53
      %p152 = pneg %p77
      %p153 = pneg %p74
      %p154 = pneg %p103
      %p155 = pneg %p100
      %p156 = scmp.lt.s32.totalorder %s14, 1
      %s157 = scalar_select %p156, %s14, 1
      %s158 = smul.addr %s157, 2
      %s159 = smul.addr %s158, 8
      %s160 = scalar_lea.vmem %s3, %s159
      %p161 = scmp.lt.s32.totalorder %s14, 1
      %s162 = scalar_select %p161, %s14, 1
      %s163 = smul.addr %s162, 2
      %s164 = smul.addr %s163, 8
      %s165 = scalar_lea.vmem %s0, %s164
      %p166 = scmp.lt.s32.totalorder %s14, 1
      %s167 = scalar_select %p166, %s14, 1
      %s168 = smul.addr %s167, 2
      %s169 = smul.addr %s168, 8
      %s170 = scalar_lea.vmem %s3, %s169
      %v172 = vlaneseq
      %v173 = vand.u32 %v172, 127
      %v174 = vadd.s32 %v173, 128
      %v175 = vand.u32 %v173, 15
      %v176 = vand.u32 %v174, 15
      %v177 = vld [vmem:[%s1] sm:$0xf]
      %s178 = scalar_lea.vmem %s1, 4
      %v179 = vld [vmem:[%s178] sm:$0xf]
      %s180 = scalar_lea.vmem %s1, 8
      %v181 = vld [vmem:[%s180] sm:$0xf]
      %s182 = scalar_lea.vmem %s1, 12
      %v183 = vld [vmem:[%s182] sm:$0xf]
      %s184 = scalar_lea.vmem %s1, 16
      %v185 = vld [vmem:[%s184] sm:$0xf]
      %s186 = scalar_lea.vmem %s1, 20
      %v187 = vld [vmem:[%s186] sm:$0xf]
      %s188 = scalar_lea.vmem %s1, 24
      %v189 = vld [vmem:[%s188] sm:$0xf]
      %s190 = scalar_lea.vmem %s1, 28
      %v191 = vld [vmem:[%s190] sm:$0xf]
      %s192 = scalar_lea.vmem %s1, 32
      %v193 = vld [vmem:[%s192] sm:$0xf]
      %v194 = vld [vmem:[%s2] sm:$0xf]
      %s195 = scalar_lea.vmem %s2, 4
      %v196 = vld [vmem:[%s195] sm:$0xf]
      %s197 = scalar_lea.vmem %s2, 8
      %v198 = vld [vmem:[%s197] sm:$0xf]
      %s199 = scalar_lea.vmem %s2, 12
      %v200 = vld [vmem:[%s199] sm:$0xf]
      %s201 = scalar_lea.vmem %s2, 16
      %v202 = vld [vmem:[%s201] sm:$0xf]
      %s203 = scalar_lea.vmem %s2, 20
      %v204 = vld [vmem:[%s203] sm:$0xf]
      %s205 = scalar_lea.vmem %s2, 24
      %v206 = vld [vmem:[%s205] sm:$0xf]
      %s207 = scalar_lea.vmem %s2, 28
      %v208 = vld [vmem:[%s207] sm:$0xf]
      %s209 = scalar_lea.vmem %s2, 32
      %v210 = vld [vmem:[%s209] sm:$0xf]
      %v211 = vld [vmem:[%s165] sm:$0xff]
      %v212 = vld [vmem:[%s165 + $0x8] sm:$0xff]
      %213 = vrot.lane.b32.xlu0 %v211, 16
      %v214 = vpop.permute.xlu0 %213
      %215 = vrot.lane.b32.xlu0 %v212, 16
      %v216 = vpop.permute.xlu0 %215
      %vm217 = vcmp.lt.s32.totalorder %v173, 16
      %v218 = vsel %vm217, %v214, %v216
      %v219 = vsel %vm217, %v216, %v214
      %vm220 = vcmp.ge.s32.totalorder %v173, 0
      %vm221 = vcmp.ge.s32.totalorder %v174, 0
      %vm222 = vcmp.lt.s32.totalorder %v174, 16
      %vm223 = vmand %vm220, %vm217
      %vm224 = vmand %vm221, %vm222
      %225 = vrot.lane.b32.xlu0 %v211, 112
      %v226 = vpop.permute.xlu0 %225
      %227 = vrot.lane.b32.xlu0 %v212, 112
      %v228 = vpop.permute.xlu0 %227
      %vm229 = vcmp.lt.s32.totalorder %v173, 112
      %v230 = vsel %vm229, %v226, %v228
      %v231 = vsel %vm229, %v228, %v226
      %v232 = vsel %vm223, %v230, %v219
      %v233 = vsel %vm224, %v231, %v218
      %234 = vrot.lane.b32.xlu0 %v232, 1
      %v235 = vpop.permute.xlu0 %234
      %236 = vrot.lane.b32.xlu0 %v233, 1
      %v237 = vpop.permute.xlu0 %236
      %vm238 = vcmp.lt.s32.totalorder %v173, 1
      %v239 = vsel %vm238, %v235, %v237
      %v240 = vsel %vm238, %v237, %v235
      %vm241 = vcmp.eq.s32.totalorder %v175, 0
      %vm242 = vcmp.eq.s32.totalorder %v176, 0
      %243 = vrot.lane.b32.xlu0 %v232, 127
      %v244 = vpop.permute.xlu0 %243
      %245 = vrot.lane.b32.xlu0 %v233, 127
      %v246 = vpop.permute.xlu0 %245
      %vm247 = vcmp.lt.s32.totalorder %v173, 127
      %v248 = vsel %vm247, %v244, %v246
      %v249 = vsel %vm247, %v246, %v244
      %v250 = vsel %vm241, %v248, %v240
      %v251 = vsel %vm242, %v249, %v239
      %v252 = vpack.c.bf16 %v250, %v250
      %v253 = vpack.c.bf16 %v251, %v251
      %v254 = vpack.c.bf16 %v232, %v232
      %v255 = vpack.c.bf16 %v233, %v233
      %vm256 = vcmask 64512
      %v258 = vsel %vm256, %v179, 0
      %vm260 = vcmask 1043456
      %v262 = vsel %vm260, %v254, 0
      %v265 = vsel %vm260, %v255, 0
      %267 = vmatpush.bf16.msra.mxu0 0
      %268 = vmatpush.bf16.msra.mxu0 0
      %269 = vmatpush.bf16.msra.mxu0 0
      %270 = vmatpush.bf16.msra.mxu0 0
      %271 = vmatpush.bf16.msra.mxu0 0
      %272 = vmatpush.bf16.msra.mxu0 0
      %273 = vmatpush.bf16.msra.mxu0 0
      %274 = vmatpush.bf16.msra.mxu0 %v262
      %275 = vmatmul.bf16.gmra.mxu0 %v258
      %v276 = vpop.f32.mrf.mxu0
      %v277 = vadd.f32 0.0, %v276
      %v278 = vpop.f32.mrf.mxu0
      %279 = vdwg.mxu0
      %280 = vmatpush.bf16.msra.mxu0 0
      %281 = vmatpush.bf16.msra.mxu0 0
      %282 = vmatpush.bf16.msra.mxu0 0
      %283 = vmatpush.bf16.msra.mxu0 0
      %284 = vmatpush.bf16.msra.mxu0 0
      %285 = vmatpush.bf16.msra.mxu0 0
      %286 = vmatpush.bf16.msra.mxu0 0
      %287 = vmatpush.bf16.msra.mxu0 %v265
      %288 = vmatmul.bf16.gmra.mxu0 %v258
      %v289 = vpop.f32.mrf.mxu0
      %v290 = vadd.f32 0.0, %v289
      %v291 = vpop.f32.mrf.mxu0
      %292 = vdwg.mxu0
      %v294 = vsel %vm256, %v177, 0
      %v297 = vsel %vm260, %v252, 0
      %v300 = vsel %vm260, %v253, 0
      %302 = vmatpush.bf16.msra.mxu0 0
      %303 = vmatpush.bf16.msra.mxu0 0
      %304 = vmatpush.bf16.msra.mxu0 0
      %305 = vmatpush.bf16.msra.mxu0 0
      %306 = vmatpush.bf16.msra.mxu0 0
      %307 = vmatpush.bf16.msra.mxu0 0
      %308 = vmatpush.bf16.msra.mxu0 0
      %309 = vmatpush.bf16.msra.mxu0 %v297
      %310 = vmatmul.bf16.gmra.mxu0 %v294
      %v311 = vpop.f32.mrf.mxu0
      %v312 = vadd.f32 %v277, %v311
      %v313 = vpop.f32.mrf.mxu0
      %314 = vdwg.mxu0
      %315 = vmatpush.bf16.msra.mxu0 0
      %316 = vmatpush.bf16.msra.mxu0 0
      %317 = vmatpush.bf16.msra.mxu0 0
      %318 = vmatpush.bf16.msra.mxu0 0
      %319 = vmatpush.bf16.msra.mxu0 0
      %320 = vmatpush.bf16.msra.mxu0 0
      %321 = vmatpush.bf16.msra.mxu0 0
      %322 = vmatpush.bf16.msra.mxu0 %v300
      %323 = vmatmul.bf16.gmra.mxu0 %v294
      %v324 = vpop.f32.mrf.mxu0
      %v325 = vadd.f32 %v290, %v324
      %v326 = vpop.f32.mrf.mxu0
      %327 = vdwg.mxu0
      %vm328 = vcmp.eq.s32.totalorder %v175, 15
      %vm329 = vcmp.eq.s32.totalorder %v176, 15
      %v330 = vsel %vm328, %v240, %v248
      %v331 = vsel %vm329, %v239, %v249
      %v332 = vpack.c.bf16 %v330, %v330
      %v333 = vpack.c.bf16 %v331, %v331
      %v335 = vsel %vm256, %v181, 0
      %v338 = vsel %vm260, %v332, 0
      %v341 = vsel %vm260, %v333, 0
      %343 = vmatpush.bf16.msra.mxu0 0
      %344 = vmatpush.bf16.msra.mxu0 0
      %345 = vmatpush.bf16.msra.mxu0 0
      %346 = vmatpush.bf16.msra.mxu0 0
      %347 = vmatpush.bf16.msra.mxu0 0
      %348 = vmatpush.bf16.msra.mxu0 0
      %349 = vmatpush.bf16.msra.mxu0 0
      %350 = vmatpush.bf16.msra.mxu0 %v338
      %351 = vmatmul.bf16.gmra.mxu0 %v335
      %v352 = vpop.f32.mrf.mxu0
      %v353 = vadd.f32 0.0, %v352
      %v354 = vpop.f32.mrf.mxu0
      %355 = vdwg.mxu0
      %356 = vmatpush.bf16.msra.mxu0 0
      %357 = vmatpush.bf16.msra.mxu0 0
      %358 = vmatpush.bf16.msra.mxu0 0
      %359 = vmatpush.bf16.msra.mxu0 0
      %360 = vmatpush.bf16.msra.mxu0 0
      %361 = vmatpush.bf16.msra.mxu0 0
      %362 = vmatpush.bf16.msra.mxu0 0
      %363 = vmatpush.bf16.msra.mxu0 %v341
      %364 = vmatmul.bf16.gmra.mxu0 %v335
      %v365 = vpop.f32.mrf.mxu0
      %v366 = vadd.f32 0.0, %v365
      %v367 = vpop.f32.mrf.mxu0
      %368 = vdwg.mxu0
      %v369 = vadd.f32 %v312, %v353
      %v370 = vadd.f32 %v325, %v366
      %371 = vrot.lane.b32.xlu0 %v211, 1
      %v372 = vpop.permute.xlu0 %371
      %373 = vrot.lane.b32.xlu0 %v212, 1
      %v374 = vpop.permute.xlu0 %373
      %v375 = vsel %vm238, %v372, %v374
      %v376 = vsel %vm238, %v374, %v372
      %377 = vrot.lane.b32.xlu0 %v211, 127
      %v378 = vpop.permute.xlu0 %377
      %379 = vrot.lane.b32.xlu0 %v212, 127
      %v380 = vpop.permute.xlu0 %379
      %v381 = vsel %vm247, %v378, %v380
      %v382 = vsel %vm247, %v380, %v378
      %v383 = vsel %vm241, %v381, %v376
      %v384 = vsel %vm242, %v382, %v375
      %v385 = vpack.c.bf16 %v383, %v383
      %v386 = vpack.c.bf16 %v384, %v384
      %v388 = vsel %vm256, %v183, 0
      %v391 = vsel %vm260, %v385, 0
      %v394 = vsel %vm260, %v386, 0
      %396 = vmatpush.bf16.msra.mxu0 0
      %397 = vmatpush.bf16.msra.mxu0 0
      %398 = vmatpush.bf16.msra.mxu0 0
      %399 = vmatpush.bf16.msra.mxu0 0
      %400 = vmatpush.bf16.msra.mxu0 0
      %401 = vmatpush.bf16.msra.mxu0 0
      %402 = vmatpush.bf16.msra.mxu0 0
      %403 = vmatpush.bf16.msra.mxu0 %v391
      %404 = vmatmul.bf16.gmra.mxu0 %v388
      %v405 = vpop.f32.mrf.mxu0
      %v406 = vadd.f32 0.0, %v405
      %v407 = vpop.f32.mrf.mxu0
      %408 = vdwg.mxu0
      %409 = vmatpush.bf16.msra.mxu0 0
      %410 = vmatpush.bf16.msra.mxu0 0
      %411 = vmatpush.bf16.msra.mxu0 0
      %412 = vmatpush.bf16.msra.mxu0 0
      %413 = vmatpush.bf16.msra.mxu0 0
      %414 = vmatpush.bf16.msra.mxu0 0
      %415 = vmatpush.bf16.msra.mxu0 0
      %416 = vmatpush.bf16.msra.mxu0 %v394
      %417 = vmatmul.bf16.gmra.mxu0 %v388
      %v418 = vpop.f32.mrf.mxu0
      %v419 = vadd.f32 0.0, %v418
      %v420 = vpop.f32.mrf.mxu0
      %421 = vdwg.mxu0
      %v422 = vadd.f32 %v369, %v406
      %v423 = vadd.f32 %v370, %v419
      %v424 = vpack.c.bf16 %v211, %v211
      %v425 = vpack.c.bf16 %v212, %v212
      %v427 = vsel %vm256, %v185, 0
      %v430 = vsel %vm260, %v424, 0
      %v433 = vsel %vm260, %v425, 0
      %435 = vmatpush.bf16.msra.mxu0 0
      %436 = vmatpush.bf16.msra.mxu0 0
      %437 = vmatpush.bf16.msra.mxu0 0
      %438 = vmatpush.bf16.msra.mxu0 0
      %439 = vmatpush.bf16.msra.mxu0 0
      %440 = vmatpush.bf16.msra.mxu0 0
      %441 = vmatpush.bf16.msra.mxu0 0
      %442 = vmatpush.bf16.msra.mxu0 %v430
      %443 = vmatmul.bf16.gmra.mxu0 %v427
      %v444 = vpop.f32.mrf.mxu0
      %v445 = vadd.f32 0.0, %v444
      %v446 = vpop.f32.mrf.mxu0
      %447 = vdwg.mxu0
      %448 = vmatpush.bf16.msra.mxu0 0
      %449 = vmatpush.bf16.msra.mxu0 0
      %450 = vmatpush.bf16.msra.mxu0 0
      %451 = vmatpush.bf16.msra.mxu0 0
      %452 = vmatpush.bf16.msra.mxu0 0
      %453 = vmatpush.bf16.msra.mxu0 0
      %454 = vmatpush.bf16.msra.mxu0 0
      %455 = vmatpush.bf16.msra.mxu0 %v433
      %456 = vmatmul.bf16.gmra.mxu0 %v427
      %v457 = vpop.f32.mrf.mxu0
      %v458 = vadd.f32 0.0, %v457
      %v459 = vpop.f32.mrf.mxu0
      %460 = vdwg.mxu0
      %v461 = vadd.f32 %v422, %v445
      %v462 = vadd.f32 %v423, %v458
      %v463 = vsel %vm328, %v376, %v381
      %v464 = vsel %vm329, %v375, %v382
      %v465 = vpack.c.bf16 %v463, %v463
      %v466 = vpack.c.bf16 %v464, %v464
      %v468 = vsel %vm256, %v187, 0
      %v471 = vsel %vm260, %v465, 0
      %v474 = vsel %vm260, %v466, 0
      %476 = vmatpush.bf16.msra.mxu0 0
      %477 = vmatpush.bf16.msra.mxu0 0
      %478 = vmatpush.bf16.msra.mxu0 0
      %479 = vmatpush.bf16.msra.mxu0 0
      %480 = vmatpush.bf16.msra.mxu0 0
      %481 = vmatpush.bf16.msra.mxu0 0
      %482 = vmatpush.bf16.msra.mxu0 0
      %483 = vmatpush.bf16.msra.mxu0 %v471
      %484 = vmatmul.bf16.gmra.mxu0 %v468
      %v485 = vpop.f32.mrf.mxu0
      %v486 = vadd.f32 0.0, %v485
      %v487 = vpop.f32.mrf.mxu0
      %488 = vdwg.mxu0
      %489 = vmatpush.bf16.msra.mxu0 0
      %490 = vmatpush.bf16.msra.mxu0 0
      %491 = vmatpush.bf16.msra.mxu0 0
      %492 = vmatpush.bf16.msra.mxu0 0
      %493 = vmatpush.bf16.msra.mxu0 0
      %494 = vmatpush.bf16.msra.mxu0 0
      %495 = vmatpush.bf16.msra.mxu0 0
      %496 = vmatpush.bf16.msra.mxu0 %v474
      %497 = vmatmul.bf16.gmra.mxu0 %v468
      %v498 = vpop.f32.mrf.mxu0
      %v499 = vadd.f32 0.0, %v498
      %v500 = vpop.f32.mrf.mxu0
      %501 = vdwg.mxu0
      %v502 = vadd.f32 %v461, %v486
      %v503 = vadd.f32 %v462, %v499
      %vm504 = vcmp.ge.s32.totalorder %v173, 240
      %vm505 = vcmp.ge.s32.totalorder %v174, 240
      %vm506 = vcmp.lt.s32.totalorder %v173, 256
      %vm507 = vcmp.lt.s32.totalorder %v174, 256
      %vm508 = vmand %vm504, %vm506
      %vm509 = vmand %vm505, %vm507
      %v510 = vsel %vm508, %v219, %v230
      %v511 = vsel %vm509, %v218, %v231
      %512 = vrot.lane.b32.xlu0 %v510, 1
      %v513 = vpop.permute.xlu0 %512
      %514 = vrot.lane.b32.xlu0 %v511, 1
      %v515 = vpop.permute.xlu0 %514
      %v516 = vsel %vm238, %v513, %v515
      %v517 = vsel %vm238, %v515, %v513
      %518 = vrot.lane.b32.xlu0 %v510, 127
      %v519 = vpop.permute.xlu0 %518
      %520 = vrot.lane.b32.xlu0 %v511, 127
      %v521 = vpop.permute.xlu0 %520
      %v522 = vsel %vm247, %v519, %v521
      %v523 = vsel %vm247, %v521, %v519
      %v524 = vsel %vm241, %v522, %v517
      %v525 = vsel %vm242, %v523, %v516
      %v526 = vpack.c.bf16 %v524, %v524
      %v527 = vpack.c.bf16 %v525, %v525
      %v529 = vsel %vm256, %v189, 0
      %v532 = vsel %vm260, %v526, 0
      %v535 = vsel %vm260, %v527, 0
      %537 = vmatpush.bf16.msra.mxu0 0
      %538 = vmatpush.bf16.msra.mxu0 0
      %539 = vmatpush.bf16.msra.mxu0 0
      %540 = vmatpush.bf16.msra.mxu0 0
      %541 = vmatpush.bf16.msra.mxu0 0
      %542 = vmatpush.bf16.msra.mxu0 0
      %543 = vmatpush.bf16.msra.mxu0 0
      %544 = vmatpush.bf16.msra.mxu0 %v532
      %545 = vmatmul.bf16.gmra.mxu0 %v529
      %v546 = vpop.f32.mrf.mxu0
      %v547 = vadd.f32 0.0, %v546
      %v548 = vpop.f32.mrf.mxu0
      %549 = vdwg.mxu0
      %550 = vmatpush.bf16.msra.mxu0 0
      %551 = vmatpush.bf16.msra.mxu0 0
      %552 = vmatpush.bf16.msra.mxu0 0
      %553 = vmatpush.bf16.msra.mxu0 0
      %554 = vmatpush.bf16.msra.mxu0 0
      %555 = vmatpush.bf16.msra.mxu0 0
      %556 = vmatpush.bf16.msra.mxu0 0
      %557 = vmatpush.bf16.msra.mxu0 %v535
      %558 = vmatmul.bf16.gmra.mxu0 %v529
      %v559 = vpop.f32.mrf.mxu0
      %v560 = vadd.f32 0.0, %v559
      %v561 = vpop.f32.mrf.mxu0
      %562 = vdwg.mxu0
      %v563 = vadd.f32 %v502, %v547
      %v564 = vadd.f32 %v503, %v560
      %v565 = vpack.c.bf16 %v510, %v510
      %v566 = vpack.c.bf16 %v511, %v511
      %v568 = vsel %vm256, %v191, 0
      %v571 = vsel %vm260, %v565, 0
      %v574 = vsel %vm260, %v566, 0
      %576 = vmatpush.bf16.msra.mxu0 0
      %577 = vmatpush.bf16.msra.mxu0 0
      %578 = vmatpush.bf16.msra.mxu0 0
      %579 = vmatpush.bf16.msra.mxu0 0
      %580 = vmatpush.bf16.msra.mxu0 0
      %581 = vmatpush.bf16.msra.mxu0 0
      %582 = vmatpush.bf16.msra.mxu0 0
      %583 = vmatpush.bf16.msra.mxu0 %v571
      %584 = vmatmul.bf16.gmra.mxu0 %v568
      %v585 = vpop.f32.mrf.mxu0
      %v586 = vadd.f32 0.0, %v585
      %v587 = vpop.f32.mrf.mxu0
      %588 = vdwg.mxu0
      %589 = vmatpush.bf16.msra.mxu0 0
      %590 = vmatpush.bf16.msra.mxu0 0
      %591 = vmatpush.bf16.msra.mxu0 0
      %592 = vmatpush.bf16.msra.mxu0 0
      %593 = vmatpush.bf16.msra.mxu0 0
      %594 = vmatpush.bf16.msra.mxu0 0
      %595 = vmatpush.bf16.msra.mxu0 0
      %596 = vmatpush.bf16.msra.mxu0 %v574
      %597 = vmatmul.bf16.gmra.mxu0 %v568
      %v598 = vpop.f32.mrf.mxu0
      %v599 = vadd.f32 0.0, %v598
      %v600 = vpop.f32.mrf.mxu0
      %601 = vdwg.mxu0
      %v602 = vadd.f32 %v563, %v586
      %v603 = vadd.f32 %v564, %v599
      %v604 = vsel %vm328, %v517, %v522
      %v605 = vsel %vm329, %v516, %v523
      %v606 = vpack.c.bf16 %v604, %v604
      %v607 = vpack.c.bf16 %v605, %v605
      %v609 = vsel %vm256, %v193, 0
      %v612 = vsel %vm260, %v606, 0
      %v615 = vsel %vm260, %v607, 0
      %617 = vmatpush.bf16.msra.mxu0 0
      %618 = vmatpush.bf16.msra.mxu0 0
      %619 = vmatpush.bf16.msra.mxu0 0
      %620 = vmatpush.bf16.msra.mxu0 0
      %621 = vmatpush.bf16.msra.mxu0 0
      %622 = vmatpush.bf16.msra.mxu0 0
      %623 = vmatpush.bf16.msra.mxu0 0
      %624 = vmatpush.bf16.msra.mxu0 %v612
      %625 = vmatmul.bf16.gmra.mxu0 %v609
      %v626 = vpop.f32.mrf.mxu0
      %v627 = vadd.f32 0.0, %v626
      %v628 = vpop.f32.mrf.mxu0
      %629 = vdwg.mxu0
      %630 = vmatpush.bf16.msra.mxu0 0
      %631 = vmatpush.bf16.msra.mxu0 0
      %632 = vmatpush.bf16.msra.mxu0 0
      %633 = vmatpush.bf16.msra.mxu0 0
      %634 = vmatpush.bf16.msra.mxu0 0
      %635 = vmatpush.bf16.msra.mxu0 0
      %636 = vmatpush.bf16.msra.mxu0 0
      %637 = vmatpush.bf16.msra.mxu0 %v615
      %638 = vmatmul.bf16.gmra.mxu0 %v609
      %v639 = vpop.f32.mrf.mxu0
      %v640 = vadd.f32 0.0, %v639
      %v641 = vpop.f32.mrf.mxu0
      %642 = vdwg.mxu0
      %v643 = vadd.f32 %v602, %v627
      %v644 = vadd.f32 %v603, %v640
      %v645 = vadd.f32 %v643, %v644
      %646 = vadd.xlane.f32.xlu0 %v645
      %v647 = vpop.xlane.xlu0 %646
      %v648 = vmul.f32 %v647, 0.00390625
      %v649 = vsub.f32 %v643, %v648
      %v650 = vsub.f32 %v644, %v648
      %v651 = vmul.f32 %v649, %v649
      %v652 = vmul.f32 %v650, %v650
      %v653 = vadd.f32 %v651, %v652
      %654 = vadd.xlane.f32.xlu0 %v653
      %v655 = vpop.xlane.xlu0 %654
      %v656 = vmul.f32 %v655, 0.00390625
      %v657 = vadd.f32 %v656, 1e-05
      %v658 = vrsqrt.pop %v657
      %v659 = vmul.f32 %v658, %v657
      %v660 = vmul.f32 %v659, %v658
      %v661 = vmul.f32 0.5, %v660
      %v662 = vsub.f32 1.5, %v661
      %v663 = vmul.f32 %v658, %v662
      %vm664 = vweird.f32 %v657
      %vm665 = vweird.f32 %v658
      %vm666 = vmor %vm664, %vm665
      %v667 = vsel %vm666, %v658, %v663
      %v668 = vmul.f32 %v649, %v667
      %v669 = vmul.f32 %v650, %v667
      %v670 = vmax.f32 %v668, 0.0
      %v671 = vmax.f32 %v669, 0.0
      %672 = vrot.lane.b32.xlu0 %v670, 16
      %v673 = vpop.permute.xlu0 %672
      %674 = vrot.lane.b32.xlu0 %v671, 16
      %v675 = vpop.permute.xlu0 %674
      %v676 = vsel %vm217, %v673, %v675
      %v677 = vsel %vm217, %v675, %v673
      %678 = vrot.lane.b32.xlu0 %v670, 112
      %v679 = vpop.permute.xlu0 %678
      %680 = vrot.lane.b32.xlu0 %v671, 112
      %v681 = vpop.permute.xlu0 %680
      %v682 = vsel %vm229, %v679, %v681
      %v683 = vsel %vm229, %v681, %v679
      %v684 = vsel %vm223, %v682, %v677
      %v685 = vsel %vm224, %v683, %v676
      %686 = vrot.lane.b32.xlu0 %v684, 1
      %v687 = vpop.permute.xlu0 %686
      %688 = vrot.lane.b32.xlu0 %v685, 1
      %v689 = vpop.permute.xlu0 %688
      %v690 = vsel %vm238, %v687, %v689
      %v691 = vsel %vm238, %v689, %v687
      %692 = vrot.lane.b32.xlu0 %v684, 127
      %v693 = vpop.permute.xlu0 %692
      %694 = vrot.lane.b32.xlu0 %v685, 127
      %v695 = vpop.permute.xlu0 %694
      %v696 = vsel %vm247, %v693, %v695
      %v697 = vsel %vm247, %v695, %v693
      %v698 = vsel %vm241, %v696, %v691
      %v699 = vsel %vm242, %v697, %v690
      %v700 = vpack.c.bf16 %v698, %v698
      %v701 = vpack.c.bf16 %v699, %v699
      %v702 = vpack.c.bf16 %v684, %v684
      %v703 = vpack.c.bf16 %v685, %v685
      %v705 = vsel %vm256, %v196, 0
      %v708 = vsel %vm260, %v702, 0
      %v711 = vsel %vm260, %v703, 0
      %713 = vmatpush.bf16.msra.mxu0 0
      %714 = vmatpush.bf16.msra.mxu0 0
      %715 = vmatpush.bf16.msra.mxu0 0
      %716 = vmatpush.bf16.msra.mxu0 0
      %717 = vmatpush.bf16.msra.mxu0 0
      %718 = vmatpush.bf16.msra.mxu0 0
      %719 = vmatpush.bf16.msra.mxu0 0
      %720 = vmatpush.bf16.msra.mxu0 %v708
      %721 = vmatmul.bf16.gmra.mxu0 %v705
      %v722 = vpop.f32.mrf.mxu0
      %v723 = vadd.f32 0.0, %v722
      %v724 = vpop.f32.mrf.mxu0
      %725 = vdwg.mxu0
      %726 = vmatpush.bf16.msra.mxu0 0
      %727 = vmatpush.bf16.msra.mxu0 0
      %728 = vmatpush.bf16.msra.mxu0 0
      %729 = vmatpush.bf16.msra.mxu0 0
      %730 = vmatpush.bf16.msra.mxu0 0
      %731 = vmatpush.bf16.msra.mxu0 0
      %732 = vmatpush.bf16.msra.mxu0 0
      %733 = vmatpush.bf16.msra.mxu0 %v711
      %734 = vmatmul.bf16.gmra.mxu0 %v705
      %v735 = vpop.f32.mrf.mxu0
      %v736 = vadd.f32 0.0, %v735
      %v737 = vpop.f32.mrf.mxu0
      %738 = vdwg.mxu0
      %v740 = vsel %vm256, %v194, 0
      %v743 = vsel %vm260, %v700, 0
      %v746 = vsel %vm260, %v701, 0
      %748 = vmatpush.bf16.msra.mxu0 0
      %749 = vmatpush.bf16.msra.mxu0 0
      %750 = vmatpush.bf16.msra.mxu0 0
      %751 = vmatpush.bf16.msra.mxu0 0
      %752 = vmatpush.bf16.msra.mxu0 0
      %753 = vmatpush.bf16.msra.mxu0 0
      %754 = vmatpush.bf16.msra.mxu0 0
      %755 = vmatpush.bf16.msra.mxu0 %v743
      %756 = vmatmul.bf16.gmra.mxu0 %v740
      %v757 = vpop.f32.mrf.mxu0
      %v758 = vadd.f32 %v723, %v757
      %v759 = vpop.f32.mrf.mxu0
      %760 = vdwg.mxu0
      %761 = vmatpush.bf16.msra.mxu0 0
      %762 = vmatpush.bf16.msra.mxu0 0
      %763 = vmatpush.bf16.msra.mxu0 0
      %764 = vmatpush.bf16.msra.mxu0 0
      %765 = vmatpush.bf16.msra.mxu0 0
      %766 = vmatpush.bf16.msra.mxu0 0
      %767 = vmatpush.bf16.msra.mxu0 0
      %768 = vmatpush.bf16.msra.mxu0 %v746
      %769 = vmatmul.bf16.gmra.mxu0 %v740
      %v770 = vpop.f32.mrf.mxu0
      %v771 = vadd.f32 %v736, %v770
      %v772 = vpop.f32.mrf.mxu0
      %773 = vdwg.mxu0
      %v774 = vsel %vm328, %v691, %v696
      %v775 = vsel %vm329, %v690, %v697
      %v776 = vpack.c.bf16 %v774, %v774
      %v777 = vpack.c.bf16 %v775, %v775
      %v779 = vsel %vm256, %v198, 0
      %v782 = vsel %vm260, %v776, 0
      %v785 = vsel %vm260, %v777, 0
      %787 = vmatpush.bf16.msra.mxu0 0
      %788 = vmatpush.bf16.msra.mxu0 0
      %789 = vmatpush.bf16.msra.mxu0 0
      %790 = vmatpush.bf16.msra.mxu0 0
      %791 = vmatpush.bf16.msra.mxu0 0
      %792 = vmatpush.bf16.msra.mxu0 0
      %793 = vmatpush.bf16.msra.mxu0 0
      %794 = vmatpush.bf16.msra.mxu0 %v782
      %795 = vmatmul.bf16.gmra.mxu0 %v779
      %v796 = vpop.f32.mrf.mxu0
      %v797 = vadd.f32 0.0, %v796
      %v798 = vpop.f32.mrf.mxu0
      %799 = vdwg.mxu0
      %800 = vmatpush.bf16.msra.mxu0 0
      %801 = vmatpush.bf16.msra.mxu0 0
      %802 = vmatpush.bf16.msra.mxu0 0
      %803 = vmatpush.bf16.msra.mxu0 0
      %804 = vmatpush.bf16.msra.mxu0 0
      %805 = vmatpush.bf16.msra.mxu0 0
      %806 = vmatpush.bf16.msra.mxu0 0
      %807 = vmatpush.bf16.msra.mxu0 %v785
      %808 = vmatmul.bf16.gmra.mxu0 %v779
      %v809 = vpop.f32.mrf.mxu0
      %v810 = vadd.f32 0.0, %v809
      %v811 = vpop.f32.mrf.mxu0
      %812 = vdwg.mxu0
      %v813 = vadd.f32 %v758, %v797
      %v814 = vadd.f32 %v771, %v810
      %815 = vrot.lane.b32.xlu0 %v670, 1
      %v816 = vpop.permute.xlu0 %815
      %817 = vrot.lane.b32.xlu0 %v671, 1
      %v818 = vpop.permute.xlu0 %817
      %v819 = vsel %vm238, %v816, %v818
      %v820 = vsel %vm238, %v818, %v816
      %821 = vrot.lane.b32.xlu0 %v670, 127
      %v822 = vpop.permute.xlu0 %821
      %823 = vrot.lane.b32.xlu0 %v671, 127
      %v824 = vpop.permute.xlu0 %823
      %v825 = vsel %vm247, %v822, %v824
      %v826 = vsel %vm247, %v824, %v822
      %v827 = vsel %vm241, %v825, %v820
      %v828 = vsel %vm242, %v826, %v819
      %v829 = vpack.c.bf16 %v827, %v827
      %v830 = vpack.c.bf16 %v828, %v828
      %v832 = vsel %vm256, %v200, 0
      %v835 = vsel %vm260, %v829, 0
      %v838 = vsel %vm260, %v830, 0
      %840 = vmatpush.bf16.msra.mxu0 0
      %841 = vmatpush.bf16.msra.mxu0 0
      %842 = vmatpush.bf16.msra.mxu0 0
      %843 = vmatpush.bf16.msra.mxu0 0
      %844 = vmatpush.bf16.msra.mxu0 0
      %845 = vmatpush.bf16.msra.mxu0 0
      %846 = vmatpush.bf16.msra.mxu0 0
      %847 = vmatpush.bf16.msra.mxu0 %v835
      %848 = vmatmul.bf16.gmra.mxu0 %v832
      %v849 = vpop.f32.mrf.mxu0
      %v850 = vadd.f32 0.0, %v849
      %v851 = vpop.f32.mrf.mxu0
      %852 = vdwg.mxu0
      %853 = vmatpush.bf16.msra.mxu0 0
      %854 = vmatpush.bf16.msra.mxu0 0
      %855 = vmatpush.bf16.msra.mxu0 0
      %856 = vmatpush.bf16.msra.mxu0 0
      %857 = vmatpush.bf16.msra.mxu0 0
      %858 = vmatpush.bf16.msra.mxu0 0
      %859 = vmatpush.bf16.msra.mxu0 0
      %860 = vmatpush.bf16.msra.mxu0 %v838
      %861 = vmatmul.bf16.gmra.mxu0 %v832
      %v862 = vpop.f32.mrf.mxu0
      %v863 = vadd.f32 0.0, %v862
      %v864 = vpop.f32.mrf.mxu0
      %865 = vdwg.mxu0
      %v866 = vadd.f32 %v813, %v850
      %v867 = vadd.f32 %v814, %v863
      %v868 = vpack.c.bf16 %v670, %v670
      %v869 = vpack.c.bf16 %v671, %v671
      %v871 = vsel %vm256, %v202, 0
      %v874 = vsel %vm260, %v868, 0
      %v877 = vsel %vm260, %v869, 0
      %879 = vmatpush.bf16.msra.mxu0 0
      %880 = vmatpush.bf16.msra.mxu0 0
      %881 = vmatpush.bf16.msra.mxu0 0
      %882 = vmatpush.bf16.msra.mxu0 0
      %883 = vmatpush.bf16.msra.mxu0 0
      %884 = vmatpush.bf16.msra.mxu0 0
      %885 = vmatpush.bf16.msra.mxu0 0
      %886 = vmatpush.bf16.msra.mxu0 %v874
      %887 = vmatmul.bf16.gmra.mxu0 %v871
      %v888 = vpop.f32.mrf.mxu0
      %v889 = vadd.f32 0.0, %v888
      %v890 = vpop.f32.mrf.mxu0
      %891 = vdwg.mxu0
      %892 = vmatpush.bf16.msra.mxu0 0
      %893 = vmatpush.bf16.msra.mxu0 0
      %894 = vmatpush.bf16.msra.mxu0 0
      %895 = vmatpush.bf16.msra.mxu0 0
      %896 = vmatpush.bf16.msra.mxu0 0
      %897 = vmatpush.bf16.msra.mxu0 0
      %898 = vmatpush.bf16.msra.mxu0 0
      %899 = vmatpush.bf16.msra.mxu0 %v877
      %900 = vmatmul.bf16.gmra.mxu0 %v871
      %v901 = vpop.f32.mrf.mxu0
      %v902 = vadd.f32 0.0, %v901
      %v903 = vpop.f32.mrf.mxu0
      %904 = vdwg.mxu0
      %v905 = vadd.f32 %v866, %v889
      %v906 = vadd.f32 %v867, %v902
      %v907 = vsel %vm328, %v820, %v825
      %v908 = vsel %vm329, %v819, %v826
      %v909 = vpack.c.bf16 %v907, %v907
      %v910 = vpack.c.bf16 %v908, %v908
      %v912 = vsel %vm256, %v204, 0
      %v915 = vsel %vm260, %v909, 0
      %v918 = vsel %vm260, %v910, 0
      %920 = vmatpush.bf16.msra.mxu0 0
      %921 = vmatpush.bf16.msra.mxu0 0
      %922 = vmatpush.bf16.msra.mxu0 0
      %923 = vmatpush.bf16.msra.mxu0 0
      %924 = vmatpush.bf16.msra.mxu0 0
      %925 = vmatpush.bf16.msra.mxu0 0
      %926 = vmatpush.bf16.msra.mxu0 0
      %927 = vmatpush.bf16.msra.mxu0 %v915
      %928 = vmatmul.bf16.gmra.mxu0 %v912
      %v929 = vpop.f32.mrf.mxu0
      %v930 = vadd.f32 0.0, %v929
      %v931 = vpop.f32.mrf.mxu0
      %932 = vdwg.mxu0
      %933 = vmatpush.bf16.msra.mxu0 0
      %934 = vmatpush.bf16.msra.mxu0 0
      %935 = vmatpush.bf16.msra.mxu0 0
      %936 = vmatpush.bf16.msra.mxu0 0
      %937 = vmatpush.bf16.msra.mxu0 0
      %938 = vmatpush.bf16.msra.mxu0 0
      %939 = vmatpush.bf16.msra.mxu0 0
      %940 = vmatpush.bf16.msra.mxu0 %v918
      %941 = vmatmul.bf16.gmra.mxu0 %v912
      %v942 = vpop.f32.mrf.mxu0
      %v943 = vadd.f32 0.0, %v942
      %v944 = vpop.f32.mrf.mxu0
      %945 = vdwg.mxu0
      %v946 = vadd.f32 %v905, %v930
      %v947 = vadd.f32 %v906, %v943
      %v948 = vsel %vm508, %v677, %v682
      %v949 = vsel %vm509, %v676, %v683
      %950 = vrot.lane.b32.xlu0 %v948, 1
      %v951 = vpop.permute.xlu0 %950
      %952 = vrot.lane.b32.xlu0 %v949, 1
      %v953 = vpop.permute.xlu0 %952
      %v954 = vsel %vm238, %v951, %v953
      %v955 = vsel %vm238, %v953, %v951
      %956 = vrot.lane.b32.xlu0 %v948, 127
      %v957 = vpop.permute.xlu0 %956
      %958 = vrot.lane.b32.xlu0 %v949, 127
      %v959 = vpop.permute.xlu0 %958
      %v960 = vsel %vm247, %v957, %v959
      %v961 = vsel %vm247, %v959, %v957
      %v962 = vsel %vm241, %v960, %v955
      %v963 = vsel %vm242, %v961, %v954
      %v964 = vpack.c.bf16 %v962, %v962
      %v965 = vpack.c.bf16 %v963, %v963
      %v967 = vsel %vm256, %v206, 0
      %v970 = vsel %vm260, %v964, 0
      %v973 = vsel %vm260, %v965, 0
      %975 = vmatpush.bf16.msra.mxu0 0
      %976 = vmatpush.bf16.msra.mxu0 0
      %977 = vmatpush.bf16.msra.mxu0 0
      %978 = vmatpush.bf16.msra.mxu0 0
      %979 = vmatpush.bf16.msra.mxu0 0
      %980 = vmatpush.bf16.msra.mxu0 0
      %981 = vmatpush.bf16.msra.mxu0 0
      %982 = vmatpush.bf16.msra.mxu0 %v970
      %983 = vmatmul.bf16.gmra.mxu0 %v967
      %v984 = vpop.f32.mrf.mxu0
      %v985 = vadd.f32 0.0, %v984
      %v986 = vpop.f32.mrf.mxu0
      %987 = vdwg.mxu0
      %988 = vmatpush.bf16.msra.mxu0 0
      %989 = vmatpush.bf16.msra.mxu0 0
      %990 = vmatpush.bf16.msra.mxu0 0
      %991 = vmatpush.bf16.msra.mxu0 0
      %992 = vmatpush.bf16.msra.mxu0 0
      %993 = vmatpush.bf16.msra.mxu0 0
      %994 = vmatpush.bf16.msra.mxu0 0
      %995 = vmatpush.bf16.msra.mxu0 %v973
      %996 = vmatmul.bf16.gmra.mxu0 %v967
      %v997 = vpop.f32.mrf.mxu0
      %v998 = vadd.f32 0.0, %v997
      %v999 = vpop.f32.mrf.mxu0
      %1000 = vdwg.mxu0
      %v1001 = vadd.f32 %v946, %v985
      %v1002 = vadd.f32 %v947, %v998
      %v1003 = vpack.c.bf16 %v948, %v948
      %v1004 = vpack.c.bf16 %v949, %v949
      %v1006 = vsel %vm256, %v208, 0
      %v1009 = vsel %vm260, %v1003, 0
      %v1012 = vsel %vm260, %v1004, 0
      %1014 = vmatpush.bf16.msra.mxu0 0
      %1015 = vmatpush.bf16.msra.mxu0 0
      %1016 = vmatpush.bf16.msra.mxu0 0
      %1017 = vmatpush.bf16.msra.mxu0 0
      %1018 = vmatpush.bf16.msra.mxu0 0
      %1019 = vmatpush.bf16.msra.mxu0 0
      %1020 = vmatpush.bf16.msra.mxu0 0
      %1021 = vmatpush.bf16.msra.mxu0 %v1009
      %1022 = vmatmul.bf16.gmra.mxu0 %v1006
      %v1023 = vpop.f32.mrf.mxu0
      %v1024 = vadd.f32 0.0, %v1023
      %v1025 = vpop.f32.mrf.mxu0
      %1026 = vdwg.mxu0
      %1027 = vmatpush.bf16.msra.mxu0 0
      %1028 = vmatpush.bf16.msra.mxu0 0
      %1029 = vmatpush.bf16.msra.mxu0 0
      %1030 = vmatpush.bf16.msra.mxu0 0
      %1031 = vmatpush.bf16.msra.mxu0 0
      %1032 = vmatpush.bf16.msra.mxu0 0
      %1033 = vmatpush.bf16.msra.mxu0 0
      %1034 = vmatpush.bf16.msra.mxu0 %v1012
      %1035 = vmatmul.bf16.gmra.mxu0 %v1006
      %v1036 = vpop.f32.mrf.mxu0
      %v1037 = vadd.f32 0.0, %v1036
      %v1038 = vpop.f32.mrf.mxu0
      %1039 = vdwg.mxu0
      %v1040 = vadd.f32 %v1001, %v1024
      %v1041 = vadd.f32 %v1002, %v1037
      %v1042 = vsel %vm328, %v955, %v960
      %v1043 = vsel %vm329, %v954, %v961
      %v1044 = vpack.c.bf16 %v1042, %v1042
      %v1045 = vpack.c.bf16 %v1043, %v1043
      %v1047 = vsel %vm256, %v210, 0
      %v1050 = vsel %vm260, %v1044, 0
      %v1053 = vsel %vm260, %v1045, 0
      %1055 = vmatpush.bf16.msra.mxu0 0
      %1056 = vmatpush.bf16.msra.mxu0 0
      %1057 = vmatpush.bf16.msra.mxu0 0
      %1058 = vmatpush.bf16.msra.mxu0 0
      %1059 = vmatpush.bf16.msra.mxu0 0
      %1060 = vmatpush.bf16.msra.mxu0 0
      %1061 = vmatpush.bf16.msra.mxu0 0
      %1062 = vmatpush.bf16.msra.mxu0 %v1050
      %1063 = vmatmul.bf16.gmra.mxu0 %v1047
      %v1064 = vpop.f32.mrf.mxu0
      %v1065 = vadd.f32 0.0, %v1064
      %v1066 = vpop.f32.mrf.mxu0
      %1067 = vdwg.mxu0
      %1068 = vmatpush.bf16.msra.mxu0 0
      %1069 = vmatpush.bf16.msra.mxu0 0
      %1070 = vmatpush.bf16.msra.mxu0 0
      %1071 = vmatpush.bf16.msra.mxu0 0
      %1072 = vmatpush.bf16.msra.mxu0 0
      %1073 = vmatpush.bf16.msra.mxu0 0
      %1074 = vmatpush.bf16.msra.mxu0 0
      %1075 = vmatpush.bf16.msra.mxu0 %v1053
      %1076 = vmatmul.bf16.gmra.mxu0 %v1047
      %v1077 = vpop.f32.mrf.mxu0
      %v1078 = vadd.f32 0.0, %v1077
      %v1079 = vpop.f32.mrf.mxu0
      %1080 = vdwg.mxu0
      %v1081 = vadd.f32 %v1040, %v1065
      %v1082 = vadd.f32 %v1041, %v1078
      %v1083 = vadd.f32 %v1081, %v1082
      %1084 = vadd.xlane.f32.xlu0 %v1083
      %v1085 = vpop.xlane.xlu0 %1084
      %v1086 = vmul.f32 %v1085, 0.00390625
      %v1087 = vsub.f32 %v1081, %v1086
      %v1088 = vsub.f32 %v1082, %v1086
      %v1089 = vmul.f32 %v1087, %v1087
      %v1090 = vmul.f32 %v1088, %v1088
      %v1091 = vadd.f32 %v1089, %v1090
      %1092 = vadd.xlane.f32.xlu0 %v1091
      %v1093 = vpop.xlane.xlu0 %1092
      %v1094 = vmul.f32 %v1093, 0.00390625
      %v1095 = vadd.f32 %v1094, 1e-05
      %v1096 = vrsqrt.pop %v1095
      %v1097 = vmul.f32 %v1096, %v1095
      %v1098 = vmul.f32 %v1097, %v1096
      %v1099 = vmul.f32 0.5, %v1098
      %v1100 = vsub.f32 1.5, %v1099
      %v1101 = vmul.f32 %v1096, %v1100
      %vm1102 = vweird.f32 %v1095
      %vm1103 = vweird.f32 %v1096
      %vm1104 = vmor %vm1102, %vm1103
      %v1105 = vsel %vm1104, %v1096, %v1101
      %v1106 = vmul.f32 %v1087, %v1105
      %v1107 = vmul.f32 %v1088, %v1105
      %v1108 = vadd.f32 %v211, %v1106
      %v1109 = vadd.f32 %v212, %v1107
      %1110 = vst [vmem:[%s170] sm:$0xff] %v1108
      %1111 = vst [vmem:[%s170 + $0x8] sm:$0xff] %v1109
      %p1112 = scmp.lt.s32.totalorder %s14, 1
      %s1113 = scalar_select %p1112, %s14, 1
      %s1114 = smul.addr %s1113, 2
      %s1115 = smul.addr %s1114, 8
      %s1116 = scalar_lea.vmem %s3, %s1115
      // Predicated region
      $region33: #{resnet_block.1} parent=31 // pred_check
        %p1117 = pneg %p100
      $region34: #{resnet_block.1} parent=31 // pred_check_branch
        %1119 = sbr.rel (%p1117) target = $region36
      $region35: #{resnet_block.1} parent=31 // pred_region
        _
      $region36: #{resnet_block.1} parent=31 // pred_fallthru
        _
    $region32: #{resnet_block.1} parent=5 // pred_fallthru
      _
    %p1120 = scmp.le.s32.totalorder 2, %s9
    // Predicated region
    $region37: #{resnet_block.1} parent=5 // pred_check
      %p1121 = pneg %p1120
    $region38: #{resnet_block.1} parent=5 // pred_check_branch
      %1123 = sbr.rel (%p1121) target = $region40
    $region39: #{resnet_block.1} parent=5 // pred_region
      %s1124 = ssub.s32 %s9, 2
      // Predicated region
      $region41: #{resnet_block.1} parent=39 // pred_check
        %p1125 = pneg %p106
      $region42: #{resnet_block.1} parent=39 // pred_check_branch
        %1127 = sbr.rel (%p1125) target = $region44
      $region43: #{resnet_block.1} parent=39 // pred_region
        %p1128 = scmp.lt.s32.totalorder %s15, 1
        %s1129 = scalar_select %p1128, %s15, 1
        %s1130 = smul.addr %s1129, 2
        %s1131 = smul.addr %s1130, 8
        %s1132 = scalar_lea.vmem %s3, %s1131
      $region44: #{resnet_block.1} parent=39 // pred_fallthru
        _
    $region40: #{resnet_block.1} parent=5 // pred_fallthru
      _
  $region6: #{resnet_block.1} parent=0 // loop_footer
    %s13 = sadd.s32 1, %s9
  $region7: #{resnet_block.1} parent=0 // loop_footer_branch
    %8 = sbr.rel target = $region3
  $region8: #{resnet_block.1} parent=0 // loop_exit
    _

</llo_original>
